<compile_context>
chip_gen: v7x
topology: tpu7x:2x2x1
jax: 0.10.0
libtpu: 0.0.40
codegen_flags: <defaults>
</compile_context>

<pallas_src>
import functools

import jax
import jax.numpy as jnp
from jax.experimental import pallas as pl
from jax.experimental.pallas import tpu as pltpu

EPS = 1e-5  # PyTorch BatchNorm default eps


def resnet_block_kernel(xd_ref, t_ref, w1bp_ref, w2_ref, r1w_ref, r2n_ref,
                        wf_ref, sm_ref, o_ref, *, H):
    f32 = jnp.float32
    bf16 = jnp.bfloat16
    BH = xd_ref.shape[0]                 # B * H rows (b-major)
    L1 = xd_ref.shape[1] // 2            # W * Cin lanes
    LCO = o_ref.shape[1]                 # W * Co lanes
    WW = 2 * LCO

    xd = xd_ref[...]                     # [BH, 2*L1] = [x | x]
    x = xd[:, :L1]                       # [BH, L1]

    # Per-row validity masks for the H-direction 'same' zero padding
    # (rows are b-major: row = b*H + y).
    row = jax.lax.broadcasted_iota(jnp.int32, (BH, 1), 0)
    ry = row % H
    m_top = (ry != 0).astype(f32)        # row y-1 exists within the same image
    m_bot = (ry != H - 1).astype(f32)    # row y+1 exists within the same image

    def ky_stack(v):
        # [BH, K] -> [BH, 3K]: lane-stacked (row-1, row, row+1) copies with
        # out-of-image rows zeroed -> the 3 ky taps of the 3x3 conv become one
        # matmul against a dy-stacked Toeplitz weight.  pltpu.roll is an XLU
        # sublane rotate (idle slot), masks are VPU filler.
        up = pltpu.roll(v, 1, 0) * m_top          # [r] = v[r-1]
        dn = pltpu.roll(v, BH - 1, 0) * m_bot     # [r] = v[r+1]
        return jnp.concatenate([up, v, dn], axis=1)   # 128-aligned lane concat

    # ---- block1: BatchNorm (training batch stats) + SiLU, fused with the ----
    # ---- bypass identity path into one [SiLU(BN1(x)) | x] operand.       ----
    cs_x = jnp.sum(x, axis=0, keepdims=True)                           # [1, L1]
    cs_x2 = jnp.sum(x * x, axis=0, keepdims=True)
    mean1 = jnp.dot(cs_x, r1w_ref[...], preferred_element_type=f32)    # [1, 2*L1] = [mean | 0]
    ex2_1 = jnp.dot(cs_x2, r1w_ref[...], preferred_element_type=f32)   # [1, 2*L1] = [E[x^2] | 0]
    inv_std1 = jax.lax.rsqrt(ex2_1 - mean1 * mean1 + EPS)
    g1p = sm_ref[0:1, :2 * L1]           # [gamma1 tiled | 0]
    be1p = sm_ref[1:2, :2 * L1]          # [beta1  tiled | 0]
    low = sm_ref[7:8, :2 * L1]           # [1]*L1 | [0]*L1 lane selector
    scale1 = inv_std1 * g1p + (1.0 - low)                 # upper half -> identity
    ax = (xd - mean1) * scale1 + be1p                     # [BN1(x) | x]
    ax = ax * (low * jax.nn.sigmoid(ax) + (1.0 - low))    # SiLU on the BN half only

    # ---- fused conv1 + bypass conv: one matmul against the dy-stacked -------
    # ---- block-diagonal Toeplitz weight -> [h | bypass] in one pass.  -------
    hb = jnp.dot(ky_stack(ax).astype(bf16), w1bp_ref[...],
                 preferred_element_type=f32)              # [BH, 2*LCO]
    hb = hb + sm_ref[4:5, :]                              # + [b1 | b_bypass]
    h1 = hb[:, :LCO]
    bp = hb[:, LCO:]

    # ---- time_mlp (SiLU -> Linear, pre-folded through the scale/shift -------
    # ---- tilers) + FiLM, broadcast over each image's rows (sublanes). -------
    t = t_ref[...]
    t = t * jax.nn.sigmoid(t)
    scsh = jnp.dot(t, wf_ref[...], preferred_element_type=f32) + sm_ref[6:7, :]   # [B, 2*LCO]
    B = t.shape[0]
    scsh_rows = jnp.concatenate(
        [jnp.broadcast_to(scsh[b:b + 1, :], (H, WW)) for b in range(B)], axis=0)  # [BH, 2*LCO]
    h = h1 + scsh_rows[:, :LCO] * h1 + scsh_rows[:, LCO:]

    # ---- block2: BatchNorm + SiLU (+ Dropout p=0 identity) -> conv2 ---------
    cs_h = jnp.sum(h, axis=0, keepdims=True)
    cs_h2 = jnp.sum(h * h, axis=0, keepdims=True)
    mean2 = jnp.dot(cs_h, r2n_ref[...], preferred_element_type=f32)    # [1, LCO]
    ex2_2 = jnp.dot(cs_h2, r2n_ref[...], preferred_element_type=f32)
    inv_std2 = jax.lax.rsqrt(ex2_2 - mean2 * mean2 + EPS)
    a2 = (h - mean2) * (inv_std2 * sm_ref[2:3, :LCO]) + sm_ref[3:4, :LCO]
    a2 = a2 * jax.nn.sigmoid(a2)

    h2 = jnp.dot(ky_stack(a2).astype(bf16), w2_ref[...],
                 preferred_element_type=f32)              # [BH, LCO]

    # lane-dense output store: full 128-lane rows, no masked vst
    o_ref[...] = h2 + sm_ref[5:6, :LCO] + bp


def pack_params(params, *, B, H, W):
    """One-time host-side packing of the module parameters into TPU-friendly
    structured matrices: dy-stacked block-diagonal Toeplitz conv weights (bf16),
    per-channel stats folders with 1/n baked in, the FiLM Linear weight folded
    through the scale/shift tilers, and all small affine/bias rows coalesced
    into a single array."""
    f32 = jnp.float32
    Cin = params["g1"].shape[1]
    Co = params["b1"].shape[1]
    L1, LCO = W * Cin, W * Co
    n_pix = B * H * W
    w1 = params["w1"].reshape(3, 3, Cin, Co).astype(f32)    # [ky, kx, cin, cout]
    w2 = params["w2"].reshape(3, 3, Co, Co).astype(f32)
    wbp = params["wbp"].reshape(3, 3, Cin, Co).astype(f32)

    def row_conv_weights(w, ci, co):
        # Wr[dy, xi*ci + c, xo*co + f] = w[dy, xi-xo+1, c, f]   (banded/Toeplitz;
        # missing entries = 0 implement the W-direction 'same' zero padding)
        kx = jnp.arange(3)[:, None, None]
        xi = jnp.arange(W)[None, :, None]
        xo = jnp.arange(W)[None, None, :]
        band = (xi == xo + kx - 1).astype(f32)               # [3, W, W]
        t = jnp.einsum("kio,dkcf->dicof", band, w)           # [3, W, ci, W, co]
        return t.reshape(3, W * ci, W * co)

    w1r = row_conv_weights(w1, Cin, Co)                      # [3, W*Cin, W*Co]
    wbpr = row_conv_weights(wbp, Cin, Co)
    w2r = row_conv_weights(w2, Co, Co)                       # [3, W*Co, W*Co]

    # fused conv1|bypass weight: per-dy block-diag([w1r, wbpr]), stacked over dy
    def bdiag(a, b):
        return jnp.concatenate(
            [jnp.concatenate([a, jnp.zeros((a.shape[0], b.shape[1]), f32)], axis=1),
             jnp.concatenate([jnp.zeros((b.shape[0], a.shape[1]), f32), b], axis=1)],
            axis=0)

    w1bp = jnp.concatenate([bdiag(w1r[d], wbpr[d]) for d in range(3)],
                           axis=0).astype(jnp.bfloat16)      # [3*2*W*Cin, 2*W*Co]
    w2s = jnp.concatenate([w2r[d] for d in range(3)],
                          axis=0).astype(jnp.bfloat16)       # [3*W*Co, W*Co]

    # per-channel stats folders (sum over W positions, replicate back, / n_pix)
    r1 = jnp.kron(jnp.ones((W, W), f32), jnp.eye(Cin, dtype=f32)) / n_pix
    r2 = jnp.kron(jnp.ones((W, W), f32), jnp.eye(Co, dtype=f32)) / n_pix
    r1w = jnp.concatenate([r1, jnp.zeros((L1, L1), f32)], axis=1)   # [L1, 2*L1] (zero upper lanes)

    # FiLM: fold the Linear weight/bias through the [scale | shift] W-tilers
    tsc = jnp.concatenate([jnp.tile(jnp.eye(Co, dtype=f32), (1, W)),
                           jnp.zeros((Co, LCO), f32)], axis=0)      # [2*Co, W*Co]
    tsh = jnp.concatenate([jnp.zeros((Co, LCO), f32),
                           jnp.tile(jnp.eye(Co, dtype=f32), (1, W))], axis=0)
    tscsh = jnp.concatenate([tsc, tsh], axis=1)                     # [2*Co, 2*W*Co]
    w_film = jnp.asarray(params["wl"], f32) @ tscsh                 # [T, 2*W*Co]
    b_film = jnp.asarray(params["bl"], f32) @ tscsh                 # [1, 2*W*Co]

    # coalesced [8, 2*W*Co] array of all the small per-channel row vectors
    tile = lambda v: jnp.tile(jnp.asarray(v, f32).reshape(1, -1), (1, W))
    pad = lambda v: jnp.concatenate([v, jnp.zeros((1, 2 * LCO - v.shape[1]), f32)], axis=1)
    smalls = jnp.concatenate([
        pad(tile(params["g1"])),                                    # 0: gamma1 (lanes [0, W*Cin))
        pad(tile(params["be1"])),                                   # 1: beta1
        pad(tile(params["g2"])),                                    # 2: gamma2 (lanes [0, W*Co))
        pad(tile(params["be2"])),                                   # 3: beta2
        jnp.concatenate([tile(params["b1"]), tile(params["bbp"])], axis=1),  # 4: [b1 | b_bypass]
        pad(tile(params["b2"])),                                    # 5: b2
        b_film,                                                     # 6: FiLM bias (tiled [sc | sh])
        pad(jnp.ones((1, L1), f32)),                                # 7: BN1/SiLU lane selector
    ], axis=0)                                                      # [8, 2*W*Co]

    return dict(w1bp=w1bp, w2s=w2s, r1w=r1w, r2n=r2, w_film=w_film, smalls=smalls)


@jax.jit
def resnet_block_forward(x_nchw, t_emb, packed):
    B, Cin, H, W = x_nchw.shape
    WW = packed["smalls"].shape[1]         # 2 * W * Co
    LCO = WW // 2
    Co = LCO // W
    assert LCO % 128 == 0, "lane-dense layout assumes W*Co is a multiple of 128"

    # NCHW -> lane-dense row layout [B*H, W*Cin]; x is lane-duplicated so the
    # kernel can build the fused [SiLU(BN1(x)) | x] conv operand with only
    # 128-aligned lane operations.
    x_rows = jnp.transpose(x_nchw, (0, 2, 3, 1)).reshape(B * H, W * Cin).astype(jnp.float32)
    xd = jnp.concatenate([x_rows, x_rows], axis=1)                   # [B*H, 2*W*Cin]

    kernel = functools.partial(resnet_block_kernel, H=H)
    out_rows = pl.pallas_call(
        kernel,
        out_shape=jax.ShapeDtypeStruct((B * H, LCO), jnp.float32),
        in_specs=[pl.BlockSpec(memory_space=pltpu.MemorySpace.VMEM)] * 8,
        out_specs=pl.BlockSpec(memory_space=pltpu.MemorySpace.VMEM),
    )(xd, t_emb.astype(jnp.float32),
      packed["w1bp"], packed["w2s"], packed["r1w"], packed["r2n"],
      packed["w_film"], packed["smalls"])

    return jnp.transpose(out_rows.reshape(B, H, W, Co), (0, 3, 1, 2))   # back to NCHW


def reference_forward(x_nchw, t_emb, params):
    """Pure-JAX reference (same math, XLA convs, HIGHEST precision)."""
    Co = params["w1"].shape[-1]
    x = jnp.transpose(x_nchw, (0, 2, 3, 1))

    def bn_silu(v, g, b):
        m = jnp.mean(v, axis=(0, 1, 2), keepdims=True)
        var = jnp.mean((v - m) ** 2, axis=(0, 1, 2), keepdims=True)
        n = (v - m) / jnp.sqrt(var + EPS) * g.reshape(1, 1, 1, -1) + b.reshape(1, 1, 1, -1)
        return n * jax.nn.sigmoid(n)

    def conv3x3(v, w, b):
        wh = w.reshape(3, 3, w.shape[1], w.shape[2])
        out = jax.lax.conv_general_dilated(
            v, wh, window_strides=(1, 1), padding="SAME",
            dimension_numbers=("NHWC", "HWIO", "NHWC"),
            precision=jax.lax.Precision.HIGHEST)
        return out + b.reshape(1, 1, 1, -1)

    h = conv3x3(bn_silu(x, params["g1"], params["be1"]), params["w1"], params["b1"])
    t = t_emb * jax.nn.sigmoid(t_emb)
    te = jnp.dot(t, params["wl"], precision=jax.lax.Precision.HIGHEST) + params["bl"]
    scale = te[:, :Co][:, None, None, :]
    shift = te[:, Co:][:, None, None, :]
    h = h + scale * h + shift
    h = conv3x3(bn_silu(h, params["g2"], params["be2"]), params["w2"], params["b2"])
    bp = conv3x3(x, params["wbp"], params["bbp"])
    return jnp.transpose(h + bp, (0, 3, 1, 2))


if __name__ == "__main__":
    # ResNetBlock(ch_in=4, ch_out=8, time_emb_dim=32, kernel_size=3, mode='2D',
    #             dropout=0.0, norm_type='batch')
    B, Cin, Co, H, W, T = 2, 4, 8, 16, 16, 32

    key = jax.random.PRNGKey(0)
    ks = jax.random.split(key, 16)
    nrm = lambda k, shp, s=0.1: jax.random.normal(k, shp, jnp.float32) * s

    params = dict(
        # time_mlp Linear: [T, 2*Co], bias [1, 2*Co]
        wl=nrm(ks[0], (T, 2 * Co)), bl=nrm(ks[1], (1, 2 * Co)),
        # BatchNorm1 affine params (gamma, beta): [1, Cin]
        g1=1.0 + nrm(ks[2], (1, Cin)), be1=nrm(ks[3], (1, Cin)),
        # conv1: [9, Cin, Co] (tap-major flattened 3x3 HWIO), bias [1, Co]
        w1=nrm(ks[4], (9, Cin, Co)), b1=nrm(ks[5], (1, Co)),
        # BatchNorm2 affine params: [1, Co]
        g2=1.0 + nrm(ks[6], (1, Co)), be2=nrm(ks[7], (1, Co)),
        # conv2: [9, Co, Co], bias [1, Co]
        w2=nrm(ks[8], (9, Co, Co)), b2=nrm(ks[9], (1, Co)),
        # bypass conv (ch_in != ch_out): [9, Cin, Co], bias [1, Co]
        wbp=nrm(ks[10], (9, Cin, Co)), bbp=nrm(ks[11], (1, Co)),
    )

    x = jax.random.normal(ks[12], (B, Cin, H, W), jnp.float32)      # NCHW, like PyTorch
    t_emb = jax.random.normal(ks[13], (B, T), jnp.float32)

    packed = pack_params(params, B=B, H=H, W=W)
    out = jax.block_until_ready(resnet_block_forward(x, t_emb, packed))
    assert out.shape == (B, Co, H, W), out.shape

    ref = reference_forward(x, t_emb, params)
    max_err = float(jnp.max(jnp.abs(out - ref)))
    # Tolerance 2e-2: conv matmuls use bf16 operands (f32 accumulate) on the
    # MXU while the reference runs at Precision.HIGHEST; stats/FiLM stay f32.
    if not bool(jnp.allclose(out, ref, rtol=2e-2, atol=2e-2)):
        raise SystemExit(f"mismatch vs reference, max abs err = {max_err:e}")

    print("KERNEL_OK")
</pallas_src>

<mosaic_0001>
module attributes {stable_mosaic.version = 11 : i64} {
  func.func @resnet_block_kernel(%arg0: memref<32x128xf32, #tpu.memory_space<vmem>>, %arg1: memref<2x32xf32, #tpu.memory_space<vmem>>, %arg2: memref<384x256xbf16, #tpu.memory_space<vmem>>, %arg3: memref<384x128xbf16, #tpu.memory_space<vmem>>, %arg4: memref<64x128xf32, #tpu.memory_space<vmem>>, %arg5: memref<128x128xf32, #tpu.memory_space<vmem>>, %arg6: memref<32x256xf32, #tpu.memory_space<vmem>>, %arg7: memref<8x256xf32, #tpu.memory_space<vmem>>, %arg8: memref<32x128xf32, #tpu.memory_space<vmem>>) attributes {dimension_semantics = [], scalar_prefetch = 0 : i64, scratch_operands = 0 : i64, tpu.core_type = #tpu.core_type<tc>} {
    %c0 = arith.constant 0 : index
    %c0_0 = arith.constant 0 : index
    %0 = vector.load %arg0[%c0, %c0_0] : memref<32x128xf32, #tpu.memory_space<vmem>>, vector<32x128xf32>
    %1 = vector.extract_strided_slice %0 {offsets = [0, 0], sizes = [32, 64], strides = [1, 1]} : vector<32x128xf32> to vector<32x64xf32>
    %2 = tpu.iota {dimensions = array<i32: 0>} : vector<32x1xi32>
    %c16_i32 = arith.constant 16 : i32
    %c0_i32 = arith.constant 0 : i32
    %3 = arith.cmpi eq, %c16_i32, %c0_i32 : i32
    %c1_i32 = arith.constant 1 : i32
    %4 = arith.select %3, %c1_i32, %c16_i32 : i32
    %5 = vector.broadcast %4 : i32 to vector<32x1xi32>
    %6 = arith.remsi %2, %5 : vector<32x1xi32>
    %c0_i32_1 = arith.constant 0 : i32
    %7 = vector.broadcast %c0_i32_1 : i32 to vector<32x1xi32>
    %8 = arith.cmpi ne, %6, %7 : vector<32x1xi32>
    %c0_i32_2 = arith.constant 0 : i32
    %9 = vector.broadcast %c0_i32_2 : i32 to vector<32x1xi32>
    %10 = arith.cmpi slt, %6, %9 : vector<32x1xi32>
    %c0_i32_3 = arith.constant 0 : i32
    %11 = arith.cmpi slt, %4, %c0_i32_3 : i32
    %12 = vector.broadcast %11 : i1 to vector<32x1xi1>
    %13 = vector.broadcast %12 : vector<32x1xi1> to vector<32x1xi1>
    %14 = arith.xori %10, %13 : vector<32x1xi1>
    %15 = arith.andi %14, %8 : vector<32x1xi1>
    %16 = vector.broadcast %4 : i32 to vector<32x1xi32>
    %17 = arith.addi %6, %16 : vector<32x1xi32>
    %18 = arith.select %15, %17, %6 : vector<32x1xi1>, vector<32x1xi32>
    %c0_i32_4 = arith.constant 0 : i32
    %19 = vector.broadcast %c0_i32_4 : i32 to vector<32x1xi32>
    %20 = arith.cmpi ne, %18, %19 : vector<32x1xi32>
    %21 = arith.extui %20 : vector<32x1xi1> to vector<32x1xi32>
    %22 = arith.sitofp %21 : vector<32x1xi32> to vector<32x1xf32>
    %c15_i32 = arith.constant 15 : i32
    %23 = vector.broadcast %c15_i32 : i32 to vector<32x1xi32>
    %24 = arith.cmpi ne, %18, %23 : vector<32x1xi32>
    %25 = arith.extui %24 : vector<32x1xi1> to vector<32x1xi32>
    %26 = arith.sitofp %25 : vector<32x1xi32> to vector<32x1xf32>
    %cst = arith.constant dense<0.000000e+00> : vector<64xf32>
    %27 = vector.multi_reduction <add>, %1, %cst [0] : vector<32x64xf32> to vector<64xf32>
    %28 = vector.shape_cast %27 : vector<64xf32> to vector<1x64xf32>
    %29 = arith.mulf %1, %1 : vector<32x64xf32>
    %cst_5 = arith.constant dense<0.000000e+00> : vector<64xf32>
    %30 = vector.multi_reduction <add>, %29, %cst_5 [0] : vector<32x64xf32> to vector<64xf32>
    %31 = vector.shape_cast %30 : vector<64xf32> to vector<1x64xf32>
    %c0_6 = arith.constant 0 : index
    %c0_7 = arith.constant 0 : index
    %32 = vector.load %arg4[%c0_6, %c0_7] : memref<64x128xf32, #tpu.memory_space<vmem>>, vector<64x128xf32>
    %cst_8 = arith.constant dense<0.000000e+00> : vector<1x128xf32>
    %33 = tpu.matmul %28, %32, %cst_8 {dimension_numbers = #tpu.dot_dimension_numbers<[1], [0], [0], [1], [0, 0, 1, 1], [], []>} : vector<1x64xf32>, vector<64x128xf32>, vector<1x128xf32> -> vector<1x128xf32>
    %c0_9 = arith.constant 0 : index
    %c0_10 = arith.constant 0 : index
    %34 = vector.load %arg4[%c0_9, %c0_10] : memref<64x128xf32, #tpu.memory_space<vmem>>, vector<64x128xf32>
    %cst_11 = arith.constant dense<0.000000e+00> : vector<1x128xf32>
    %35 = tpu.matmul %31, %34, %cst_11 {dimension_numbers = #tpu.dot_dimension_numbers<[1], [0], [0], [1], [0, 0, 1, 1], [], []>} : vector<1x64xf32>, vector<64x128xf32>, vector<1x128xf32> -> vector<1x128xf32>
    %36 = arith.mulf %33, %33 : vector<1x128xf32>
    %37 = arith.subf %35, %36 : vector<1x128xf32>
    %cst_12 = arith.constant 9.99999974E-6 : f32
    %38 = vector.broadcast %cst_12 : f32 to vector<1x128xf32>
    %39 = arith.addf %37, %38 : vector<1x128xf32>
    %40 = math.rsqrt %39 : vector<1x128xf32>
    %c0_13 = arith.constant 0 : index
    %c0_14 = arith.constant 0 : index
    %41 = vector.load %arg7[%c0_13, %c0_14] : memref<8x256xf32, #tpu.memory_space<vmem>>, vector<1x128xf32>
    %c1 = arith.constant 1 : index
    %c0_15 = arith.constant 0 : index
    %42 = vector.load %arg7[%c1, %c0_15] : memref<8x256xf32, #tpu.memory_space<vmem>>, vector<1x128xf32>
    %c7 = arith.constant 7 : index
    %c0_16 = arith.constant 0 : index
    %43 = vector.load %arg7[%c7, %c0_16] : memref<8x256xf32, #tpu.memory_space<vmem>>, vector<1x128xf32>
    %44 = arith.mulf %40, %41 : vector<1x128xf32>
    %cst_17 = arith.constant 1.000000e+00 : f32
    %45 = vector.broadcast %cst_17 : f32 to vector<1x128xf32>
    %46 = arith.subf %45, %43 : vector<1x128xf32>
    %47 = arith.addf %44, %46 : vector<1x128xf32>
    %48 = vector.broadcast %33 : vector<1x128xf32> to vector<32x128xf32>
    %49 = arith.subf %0, %48 : vector<32x128xf32>
    %50 = vector.broadcast %47 : vector<1x128xf32> to vector<32x128xf32>
    %51 = arith.mulf %49, %50 : vector<32x128xf32>
    %52 = vector.broadcast %42 : vector<1x128xf32> to vector<32x128xf32>
    %53 = arith.addf %51, %52 : vector<32x128xf32>
    %54 = arith.negf %53 : vector<32x128xf32>
    %55 = math.exp %54 : vector<32x128xf32>
    %cst_18 = arith.constant 1.000000e+00 : f32
    %56 = vector.broadcast %cst_18 : f32 to vector<32x128xf32>
    %57 = arith.addf %56, %55 : vector<32x128xf32>
    %58 = arith.divf %56, %57 : vector<32x128xf32>
    %59 = vector.broadcast %43 : vector<1x128xf32> to vector<32x128xf32>
    %60 = arith.mulf %59, %58 : vector<32x128xf32>
    %cst_19 = arith.constant 1.000000e+00 : f32
    %61 = vector.broadcast %cst_19 : f32 to vector<1x128xf32>
    %62 = arith.subf %61, %43 : vector<1x128xf32>
    %63 = vector.broadcast %62 : vector<1x128xf32> to vector<32x128xf32>
    %64 = arith.addf %60, %63 : vector<32x128xf32>
    %65 = arith.mulf %53, %64 : vector<32x128xf32>
    %c1_i32_20 = arith.constant 1 : i32
    %66 = tpu.dynamic_rotate %65 by %c1_i32_20 dim 0 : vector<32x128xf32>, i32 -> vector<32x128xf32>
    %67 = vector.broadcast %22 : vector<32x1xf32> to vector<32x128xf32>
    %68 = arith.mulf %66, %67 : vector<32x128xf32>
    %c31_i32 = arith.constant 31 : i32
    %69 = tpu.dynamic_rotate %65 by %c31_i32 dim 0 : vector<32x128xf32>, i32 -> vector<32x128xf32>
    %70 = vector.broadcast %26 : vector<32x1xf32> to vector<32x128xf32>
    %71 = arith.mulf %69, %70 : vector<32x128xf32>
    %72 = tpu.concatenate %68, %65, %71 in 1 : vector<32x128xf32>, vector<32x128xf32>, vector<32x128xf32> -> vector<32x384xf32>
    %73 = arith.truncf %72 : vector<32x384xf32> to vector<32x384xbf16>
    %c0_21 = arith.constant 0 : index
    %c0_22 = arith.constant 0 : index
    %74 = vector.load %arg2[%c0_21, %c0_22] : memref<384x256xbf16, #tpu.memory_space<vmem>>, vector<384x256xbf16>
    %cst_23 = arith.constant dense<0.000000e+00> : vector<32x256xf32>
    %75 = tpu.matmul %73, %74, %cst_23 {dimension_numbers = #tpu.dot_dimension_numbers<[1], [0], [0], [1], [0, 0, 1, 1], [], []>} : vector<32x384xbf16>, vector<384x256xbf16>, vector<32x256xf32> -> vector<32x256xf32>
    %c4 = arith.constant 4 : index
    %c0_24 = arith.constant 0 : index
    %76 = vector.load %arg7[%c4, %c0_24] : memref<8x256xf32, #tpu.memory_space<vmem>>, vector<1x256xf32>
    %77 = vector.broadcast %76 : vector<1x256xf32> to vector<32x256xf32>
    %78 = arith.addf %75, %77 : vector<32x256xf32>
    %79 = vector.extract_strided_slice %78 {offsets = [0, 0], sizes = [32, 128], strides = [1, 1]} : vector<32x256xf32> to vector<32x128xf32>
    %80 = vector.extract_strided_slice %78 {offsets = [0, 128], sizes = [32, 128], strides = [1, 1]} : vector<32x256xf32> to vector<32x128xf32>
    %c0_25 = arith.constant 0 : index
    %c0_26 = arith.constant 0 : index
    %81 = vector.load %arg1[%c0_25, %c0_26] : memref<2x32xf32, #tpu.memory_space<vmem>>, vector<2x32xf32>
    %82 = arith.negf %81 : vector<2x32xf32>
    %83 = math.exp %82 : vector<2x32xf32>
    %cst_27 = arith.constant 1.000000e+00 : f32
    %84 = vector.broadcast %cst_27 : f32 to vector<2x32xf32>
    %85 = arith.addf %84, %83 : vector<2x32xf32>
    %86 = arith.divf %84, %85 : vector<2x32xf32>
    %87 = arith.mulf %81, %86 : vector<2x32xf32>
    %c0_28 = arith.constant 0 : index
    %c0_29 = arith.constant 0 : index
    %88 = vector.load %arg6[%c0_28, %c0_29] : memref<32x256xf32, #tpu.memory_space<vmem>>, vector<32x256xf32>
    %cst_30 = arith.constant dense<0.000000e+00> : vector<2x256xf32>
    %89 = tpu.matmul %87, %88, %cst_30 {dimension_numbers = #tpu.dot_dimension_numbers<[1], [0], [0], [1], [0, 0, 1, 1], [], []>} : vector<2x32xf32>, vector<32x256xf32>, vector<2x256xf32> -> vector<2x256xf32>
    %c6 = arith.constant 6 : index
    %c0_31 = arith.constant 0 : index
    %90 = vector.load %arg7[%c6, %c0_31] : memref<8x256xf32, #tpu.memory_space<vmem>>, vector<1x256xf32>
    %91 = vector.broadcast %90 : vector<1x256xf32> to vector<2x256xf32>
    %92 = arith.addf %89, %91 : vector<2x256xf32>
    %93 = vector.extract_strided_slice %92 {offsets = [0, 0], sizes = [1, 256], strides = [1, 1]} : vector<2x256xf32> to vector<1x256xf32>
    %94 = vector.shape_cast %93 : vector<1x256xf32> to vector<1x256xf32>
    %95 = vector.broadcast %94 : vector<1x256xf32> to vector<16x256xf32>
    %96 = vector.extract_strided_slice %92 {offsets = [1, 0], sizes = [1, 256], strides = [1, 1]} : vector<2x256xf32> to vector<1x256xf32>
    %97 = vector.shape_cast %96 : vector<1x256xf32> to vector<1x256xf32>
    %98 = vector.broadcast %97 : vector<1x256xf32> to vector<16x256xf32>
    %99 = tpu.concatenate %95, %98 in 0 : vector<16x256xf32>, vector<16x256xf32> -> vector<32x256xf32>
    %100 = vector.extract_strided_slice %99 {offsets = [0, 0], sizes = [32, 128], strides = [1, 1]} : vector<32x256xf32> to vector<32x128xf32>
    %101 = arith.mulf %100, %79 : vector<32x128xf32>
    %102 = arith.addf %79, %101 : vector<32x128xf32>
    %103 = vector.extract_strided_slice %99 {offsets = [0, 128], sizes = [32, 128], strides = [1, 1]} : vector<32x256xf32> to vector<32x128xf32>
    %104 = arith.addf %102, %103 : vector<32x128xf32>
    %cst_32 = arith.constant dense<0.000000e+00> : vector<128xf32>
    %105 = vector.multi_reduction <add>, %104, %cst_32 [0] : vector<32x128xf32> to vector<128xf32>
    %106 = vector.shape_cast %105 : vector<128xf32> to vector<1x128xf32>
    %107 = arith.mulf %104, %104 : vector<32x128xf32>
    %cst_33 = arith.constant dense<0.000000e+00> : vector<128xf32>
    %108 = vector.multi_reduction <add>, %107, %cst_33 [0] : vector<32x128xf32> to vector<128xf32>
    %109 = vector.shape_cast %108 : vector<128xf32> to vector<1x128xf32>
    %c0_34 = arith.constant 0 : index
    %c0_35 = arith.constant 0 : index
    %110 = vector.load %arg5[%c0_34, %c0_35] : memref<128x128xf32, #tpu.memory_space<vmem>>, vector<128x128xf32>
    %cst_36 = arith.constant dense<0.000000e+00> : vector<1x128xf32>
    %111 = tpu.matmul %106, %110, %cst_36 {dimension_numbers = #tpu.dot_dimension_numbers<[1], [0], [0], [1], [0, 0, 1, 1], [], []>} : vector<1x128xf32>, vector<128x128xf32>, vector<1x128xf32> -> vector<1x128xf32>
    %c0_37 = arith.constant 0 : index
    %c0_38 = arith.constant 0 : index
    %112 = vector.load %arg5[%c0_37, %c0_38] : memref<128x128xf32, #tpu.memory_space<vmem>>, vector<128x128xf32>
    %cst_39 = arith.constant dense<0.000000e+00> : vector<1x128xf32>
    %113 = tpu.matmul %109, %112, %cst_39 {dimension_numbers = #tpu.dot_dimension_numbers<[1], [0], [0], [1], [0, 0, 1, 1], [], []>} : vector<1x128xf32>, vector<128x128xf32>, vector<1x128xf32> -> vector<1x128xf32>
    %114 = arith.mulf %111, %111 : vector<1x128xf32>
    %115 = arith.subf %113, %114 : vector<1x128xf32>
    %cst_40 = arith.constant 9.99999974E-6 : f32
    %116 = vector.broadcast %cst_40 : f32 to vector<1x128xf32>
    %117 = arith.addf %115, %116 : vector<1x128xf32>
    %118 = math.rsqrt %117 : vector<1x128xf32>
    %119 = vector.broadcast %111 : vector<1x128xf32> to vector<32x128xf32>
    %120 = arith.subf %104, %119 : vector<32x128xf32>
    %c2 = arith.constant 2 : index
    %c0_41 = arith.constant 0 : index
    %121 = vector.load %arg7[%c2, %c0_41] : memref<8x256xf32, #tpu.memory_space<vmem>>, vector<1x128xf32>
    %122 = arith.mulf %118, %121 : vector<1x128xf32>
    %123 = vector.broadcast %122 : vector<1x128xf32> to vector<32x128xf32>
    %124 = arith.mulf %120, %123 : vector<32x128xf32>
    %c3 = arith.constant 3 : index
    %c0_42 = arith.constant 0 : index
    %125 = vector.load %arg7[%c3, %c0_42] : memref<8x256xf32, #tpu.memory_space<vmem>>, vector<1x128xf32>
    %126 = vector.broadcast %125 : vector<1x128xf32> to vector<32x128xf32>
    %127 = arith.addf %124, %126 : vector<32x128xf32>
    %128 = arith.negf %127 : vector<32x128xf32>
    %129 = math.exp %128 : vector<32x128xf32>
    %cst_43 = arith.constant 1.000000e+00 : f32
    %130 = vector.broadcast %cst_43 : f32 to vector<32x128xf32>
    %131 = arith.addf %130, %129 : vector<32x128xf32>
    %132 = arith.divf %130, %131 : vector<32x128xf32>
    %133 = arith.mulf %127, %132 : vector<32x128xf32>
    %c1_i32_44 = arith.constant 1 : i32
    %134 = tpu.dynamic_rotate %133 by %c1_i32_44 dim 0 : vector<32x128xf32>, i32 -> vector<32x128xf32>
    %135 = vector.broadcast %22 : vector<32x1xf32> to vector<32x128xf32>
    %136 = arith.mulf %134, %135 : vector<32x128xf32>
    %c31_i32_45 = arith.constant 31 : i32
    %137 = tpu.dynamic_rotate %133 by %c31_i32_45 dim 0 : vector<32x128xf32>, i32 -> vector<32x128xf32>
    %138 = vector.broadcast %26 : vector<32x1xf32> to vector<32x128xf32>
    %139 = arith.mulf %137, %138 : vector<32x128xf32>
    %140 = tpu.concatenate %136, %133, %139 in 1 : vector<32x128xf32>, vector<32x128xf32>, vector<32x128xf32> -> vector<32x384xf32>
    %141 = arith.truncf %140 : vector<32x384xf32> to vector<32x384xbf16>
    %c0_46 = arith.constant 0 : index
    %c0_47 = arith.constant 0 : index
    %142 = vector.load %arg3[%c0_46, %c0_47] : memref<384x128xbf16, #tpu.memory_space<vmem>>, vector<384x128xbf16>
    %cst_48 = arith.constant dense<0.000000e+00> : vector<32x128xf32>
    %143 = tpu.matmul %141, %142, %cst_48 {dimension_numbers = #tpu.dot_dimension_numbers<[1], [0], [0], [1], [0, 0, 1, 1], [], []>} : vector<32x384xbf16>, vector<384x128xbf16>, vector<32x128xf32> -> vector<32x128xf32>
    %c5 = arith.constant 5 : index
    %c0_49 = arith.constant 0 : index
    %144 = vector.load %arg7[%c5, %c0_49] : memref<8x256xf32, #tpu.memory_space<vmem>>, vector<1x128xf32>
    %145 = vector.broadcast %144 : vector<1x128xf32> to vector<32x128xf32>
    %146 = arith.addf %143, %145 : vector<32x128xf32>
    %147 = arith.addf %146, %80 : vector<32x128xf32>
    %c0_50 = arith.constant 0 : index
    %c0_51 = arith.constant 0 : index
    %148 = vector.load %arg8[%c0_50, %c0_51] : memref<32x128xf32, #tpu.memory_space<vmem>>, vector<32x128xf32>
    tpu.vector_store %arg8[%c0_50, %c0_51], %147 {strides = array<i32>} : memref<32x128xf32, #tpu.memory_space<vmem>>, vector<32x128xf32>,
    return
  }
}

</mosaic_0001>

<llo_original>
// kernel: resnet_block_forward.1
$region0: #{resnet_block_forward.1}
  #allocation0 [shape = 'u32[]', space=smem, size = 0x4, offset = 0x4, fixed_abs, tag = 'smem constant byte address 0x4 - core index']
  #allocation1 [shape = 'u32[144,128]{1,0:T(1,128)}', space=vmem, size = 0x12000, scoped, tag = 'internal scratch']
  %s0 = inlined_call_operand.vmem [shape: f32[32,128], index: 0, kind: input, shape index: {}]
  %s1 = inlined_call_operand.vmem [shape: f32[2,32], index: 1, kind: input, shape index: {}]
  %s2 = inlined_call_operand.vmem [shape: bf16[384,256], index: 2, kind: input, shape index: {}]
  %s3 = inlined_call_operand.vmem [shape: bf16[384,128], index: 3, kind: input, shape index: {}]
  %s4 = inlined_call_operand.hbm [shape: f32[64,128], index: 4, kind: input, shape index: {}]
  %s5 = inlined_call_operand.hbm [shape: f32[128,128], index: 5, kind: input, shape index: {}]
  %s6 = inlined_call_operand.hbm [shape: f32[32,256], index: 6, kind: input, shape index: {}]
  %s7 = inlined_call_operand.vmem [shape: f32[8,256], index: 7, kind: input, shape index: {}]
  %s8 = inlined_call_operand.vmem [shape: f32[32,128], index: 8, kind: output, shape index: {}]
  %s9 = sld [smem:[#allocation0]]
  $region54: #{resnet_block_forward.1} parent=0
    _
  %s11 = ssub.s32 1, %s9
  %s12 = scalar_select 0, %s11, %s9
  $region1: #{resnet_block_forward.1} parent=0
    #allocation2 [shape = 'u8[32768]{0}', space=vmem, size = 0x8000, scoped, tag = 'input window, operand 4, single buffered']
    #allocation3 [shape = 's32[1]{0}', space=sflag, size = 0x4, scoped, tag = 'scoped memory for resnet_block_forward.1']
    #allocation4 [shape = 'u8[65536]{0}', space=vmem, size = 0x10000, scoped, tag = 'input window, operand 5, single buffered']
    #allocation5 [shape = 's32[1]{0}', space=sflag, size = 0x4, scoped, tag = 'scoped memory for resnet_block_forward.1']
    #allocation6 [shape = 'u8[32768]{0}', space=vmem, size = 0x8000, scoped, tag = 'input window, operand 6, single buffered']
    %13 = vsyncpa [#allocation3], 0
    %14 = vsyncpa [#allocation5], 0
    // Predicated region
    $region2: #{resnet_block_forward.1} parent=1 // pred_check
      _
    $region3: #{resnet_block_forward.1} parent=1 // pred_check_branch
      %16 = sbr.rel (0) target = $region5
    $region4: #{resnet_block_forward.1} parent=1 // pred_region
      _
    $region5: #{resnet_block_forward.1} parent=1 // pred_fallthru
      _
    // Predicated region
    $region6: #{resnet_block_forward.1} parent=1 // pred_check
      _
    $region7: #{resnet_block_forward.1} parent=1 // pred_check_branch
      %18 = sbr.rel (0) target = $region9
    $region8: #{resnet_block_forward.1} parent=1 // pred_region
      _
    $region9: #{resnet_block_forward.1} parent=1 // pred_fallthru
      _
    // Predicated region
    $region10: #{resnet_block_forward.1} parent=1 // pred_check
      _
    $region11: #{resnet_block_forward.1} parent=1 // pred_check_branch
      %20 = sbr.rel (0) target = $region13
    $region12: #{resnet_block_forward.1} parent=1 // pred_region
      _
    $region13: #{resnet_block_forward.1} parent=1 // pred_fallthru
      _
    // Predicated region
    $region14: #{resnet_block_forward.1} parent=1 // pred_check
      _
    $region15: #{resnet_block_forward.1} parent=1 // pred_check_branch
      %22 = sbr.rel (0) target = $region17
    $region16: #{resnet_block_forward.1} parent=1 // pred_region
      _
    $region17: #{resnet_block_forward.1} parent=1 // pred_fallthru
      _
    // Predicated region
    $region18: #{resnet_block_forward.1} parent=1 // pred_check
      _
    $region19: #{resnet_block_forward.1} parent=1 // pred_check_branch
      %24 = sbr.rel (0) target = $region21
    $region20: #{resnet_block_forward.1} parent=1 // pred_region
      %s26 = ssub.s32 1024, 1024
      %27 = vsyncadd [#allocation3], %s26
      %s28 = sshll.u32 [#allocation2], 4
      %s29 = int_to_ptr.vmem [resolvable:$true] %s28
      %34 = dma.hbm_to_vmem [thread:$0]  %s4, 1024, %s29, [#allocation3], 128, 128, 8
    $region21: #{resnet_block_forward.1} parent=1 // pred_fallthru
      _
    // Predicated region
    $region22: #{resnet_block_forward.1} parent=1 // pred_check
      _
    $region23: #{resnet_block_forward.1} parent=1 // pred_check_branch
      %36 = sbr.rel (0) target = $region25
    $region24: #{resnet_block_forward.1} parent=1 // pred_region
      %s38 = ssub.s32 2048, 2048
      %39 = vsyncadd [#allocation5], %s38
      %s40 = sshll.u32 [#allocation4], 4
      %s41 = int_to_ptr.vmem [resolvable:$true] %s40
      %46 = dma.hbm_to_vmem [thread:$0]  %s5, 2048, %s41, [#allocation5], 128, 128, 8
    $region25: #{resnet_block_forward.1} parent=1 // pred_fallthru
      _
    // Predicated region
    $region26: #{resnet_block_forward.1} parent=1 // pred_check
      _
    $region27: #{resnet_block_forward.1} parent=1 // pred_check_branch
      %48 = sbr.rel (0) target = $region29
    $region28: #{resnet_block_forward.1} parent=1 // pred_region
      %s50 = ssub.s32 1024, 1024
      %51 = vsyncadd [#allocation5], %s50
      %s52 = sshll.u32 [#allocation6], 4
      %s53 = int_to_ptr.vmem [resolvable:$true] %s52
      %58 = dma.hbm_to_vmem [thread:$0]  %s6, 1024, %s53, [#allocation5], 256, 256, 16
    $region29: #{resnet_block_forward.1} parent=1 // pred_fallthru
      _
    // Predicated region
    $region30: #{resnet_block_forward.1} parent=1 // pred_check
      _
    $region31: #{resnet_block_forward.1} parent=1 // pred_check_branch
      %60 = sbr.rel (0) target = $region33
    $region32: #{resnet_block_forward.1} parent=1 // pred_region
      _
    $region33: #{resnet_block_forward.1} parent=1 // pred_fallthru
      _
    // Predicated region
    $region34: #{resnet_block_forward.1} parent=1 // pred_check
      _
    $region35: #{resnet_block_forward.1} parent=1 // pred_check_branch
      %62 = sbr.rel (0) target = $region37
    $region36: #{resnet_block_forward.1} parent=1 // pred_region
      %63 = dma.done [#allocation3], 1024
    $region37: #{resnet_block_forward.1} parent=1 // pred_fallthru
      _
    // Predicated region
    $region38: #{resnet_block_forward.1} parent=1 // pred_check
      _
    $region39: #{resnet_block_forward.1} parent=1 // pred_check_branch
      %65 = sbr.rel (0) target = $region41
    $region40: #{resnet_block_forward.1} parent=1 // pred_region
      %66 = dma.done [#allocation5], 2048
    $region41: #{resnet_block_forward.1} parent=1 // pred_fallthru
      _
    // Predicated region
    $region42: #{resnet_block_forward.1} parent=1 // pred_check
      _
    $region43: #{resnet_block_forward.1} parent=1 // pred_check_branch
      %68 = sbr.rel (0) target = $region45
    $region44: #{resnet_block_forward.1} parent=1 // pred_region
      %69 = dma.done [#allocation5], 1024
    $region45: #{resnet_block_forward.1} parent=1 // pred_fallthru
      _
    %v71 = vld [vmem:[%s0] sm:$0xff]
    %v72 = vld [vmem:[%s0 + $0x8] sm:$0xff]
    %v73 = vld [vmem:[%s0 + $0x10] sm:$0xff]
    %v74 = vld [vmem:[%s0 + $0x18] sm:$0xff]
    %v75 = vlaneseq
    %v76 = vshrl.u32 %v75, 7
    %v77 = vadd.s32 %v76, 8
    %v78 = vadd.s32 %v76, 16
    %v79 = vadd.s32 %v76, 24
    %vm80 = vcmp.lt.s32.totalorder %v76, 0
    %v81 = vsub.s32 0, %v76
    %v82 = vsel %vm80, %v81, %v76
    %v83 = vshrl.u32 %v82, 4
    %v84 = vand.u32 %v82, 15
    %v85 = vsub.s32 0, %v84
    %v86 = vsel %vm80, %v85, %v84
    %vm87 = vcmp.lt.s32.totalorder %v77, 0
    %v88 = vsub.s32 0, %v77
    %v89 = vsel %vm87, %v88, %v77
    %v90 = vshrl.u32 %v89, 4
    %v91 = vand.u32 %v89, 15
    %v92 = vsub.s32 0, %v91
    %v93 = vsel %vm87, %v92, %v91
    %vm94 = vcmp.lt.s32.totalorder %v78, 0
    %v95 = vsub.s32 0, %v78
    %v96 = vsel %vm94, %v95, %v78
    %v97 = vshrl.u32 %v96, 4
    %v98 = vand.u32 %v96, 15
    %v99 = vsub.s32 0, %v98
    %v100 = vsel %vm94, %v99, %v98
    %vm101 = vcmp.lt.s32.totalorder %v79, 0
    %v102 = vsub.s32 0, %v79
    %v103 = vsel %vm101, %v102, %v79
    %v104 = vshrl.u32 %v103, 4
    %v105 = vand.u32 %v103, 15
    %v106 = vsub.s32 0, %v105
    %v107 = vsel %vm101, %v106, %v105
    %vm108 = vcmp.ne.s32.totalorder %v86, 0
    %vm109 = vcmp.ne.s32.totalorder %v93, 0
    %vm110 = vcmp.ne.s32.totalorder %v100, 0
    %vm111 = vcmp.ne.s32.totalorder %v107, 0
    %vm112 = vcmp.lt.s32.totalorder %v86, 0
    %vm113 = vcmp.lt.s32.totalorder %v93, 0
    %vm114 = vcmp.lt.s32.totalorder %v100, 0
    %vm115 = vcmp.lt.s32.totalorder %v107, 0
    %vm116 = vmand %vm112, %vm108
    %vm117 = vmand %vm113, %vm109
    %vm118 = vmand %vm114, %vm110
    %vm119 = vmand %vm115, %vm111
    %v120 = vadd.s32 %v86, 16
    %v121 = vadd.s32 %v93, 16
    %v122 = vadd.s32 %v100, 16
    %v123 = vadd.s32 %v107, 16
    %v124 = vsel %vm116, %v120, %v86
    %v125 = vsel %vm117, %v121, %v93
    %v126 = vsel %vm118, %v122, %v100
    %v127 = vsel %vm119, %v123, %v107
    %vm128 = vcmp.ne.s32.totalorder %v124, 0
    %vm129 = vcmp.ne.s32.totalorder %v125, 0
    %vm130 = vcmp.ne.s32.totalorder %v126, 0
    %vm131 = vcmp.ne.s32.totalorder %v127, 0
    %v132 = vsel %vm128, 1, 0
    %v133 = vsel %vm129, 1, 0
    %v134 = vsel %vm130, 1, 0
    %v135 = vsel %vm131, 1, 0
    %v136 = vcvt.s32.f32 %v132
    %v137 = vcvt.s32.f32 %v133
    %v138 = vcvt.s32.f32 %v134
    %v139 = vcvt.s32.f32 %v135
    %vm140 = vcmp.ne.s32.totalorder %v124, 15
    %vm141 = vcmp.ne.s32.totalorder %v125, 15
    %vm142 = vcmp.ne.s32.totalorder %v126, 15
    %vm143 = vcmp.ne.s32.totalorder %v127, 15
    %v144 = vsel %vm140, 1, 0
    %v145 = vsel %vm141, 1, 0
    %v146 = vsel %vm142, 1, 0
    %v147 = vsel %vm143, 1, 0
    %v148 = vcvt.s32.f32 %v144
    %v149 = vcvt.s32.f32 %v145
    %v150 = vcvt.s32.f32 %v146
    %v151 = vcvt.s32.f32 %v147
    %vm152 = vcmask 523264
    %v153 = vsel %vm152, %v71, 0.0
    %v154 = vsel %vm152, %v72, 0.0
    %v155 = vadd.f32 %v153, %v154
    %v156 = vsel %vm152, %v73, 0.0
    %v157 = vadd.f32 %v155, %v156
    %v158 = vsel %vm152, %v74, 0.0
    %v159 = vadd.f32 %v157, %v158
    %v160 = vrot.slane %v159, 4
    %v161 = vadd.f32 %v159, %v160
    %v162 = vrot.slane %v161, 2
    %v163 = vadd.f32 %v161, %v162
    %v164 = vrot.slane %v163, 1
    %v165 = vadd.f32 %v163, %v164
    %v166 = vmul.f32 %v71, %v71
    %v167 = vmul.f32 %v72, %v72
    %v168 = vmul.f32 %v73, %v73
    %v169 = vmul.f32 %v74, %v74
    %v170 = vsel %vm152, %v166, 0.0
    %v171 = vsel %vm152, %v167, 0.0
    %v172 = vadd.f32 %v170, %v171
    %v173 = vsel %vm152, %v168, 0.0
    %v174 = vadd.f32 %v172, %v173
    %v175 = vsel %vm152, %v169, 0.0
    %v176 = vadd.f32 %v174, %v175
    %v177 = vrot.slane %v176, 4
    %v178 = vadd.f32 %v176, %v177
    %v179 = vrot.slane %v178, 2
    %v180 = vadd.f32 %v178, %v179
    %v181 = vrot.slane %v180, 1
    %v182 = vadd.f32 %v180, %v181
    %v183 = vld [vmem:[#allocation2] sm:$0xff]
    %v184 = vld [vmem:[#allocation2 + $0x8] sm:$0xff]
    %v185 = vld [vmem:[#allocation2 + $0x10] sm:$0xff]
    %v186 = vld [vmem:[#allocation2 + $0x18] sm:$0xff]
    %v187 = vld [vmem:[#allocation2 + $0x20] sm:$0xff]
    %v188 = vld [vmem:[#allocation2 + $0x28] sm:$0xff]
    %v189 = vld [vmem:[#allocation2 + $0x30] sm:$0xff]
    %v190 = vld [vmem:[#allocation2 + $0x38] sm:$0xff]
    %v192 = vsel %vm152, %v165, 0
    %194 = vmatprep.subr.mxu0 0.0
    %195 = vmatpush1.msra.mxu0 %v183
    %196 = vmatprep.subr.mxu0 0.0
    %197 = vmatpush1.msra.mxu0 %v184
    %198 = vmatprep.subr.mxu0 0.0
    %199 = vmatpush1.msra.mxu0 %v185
    %200 = vmatprep.subr.mxu0 0.0
    %201 = vmatpush1.msra.mxu0 %v186
    %202 = vmatprep.subr.mxu0 0.0
    %203 = vmatpush1.msra.mxu0 %v187
    %204 = vmatprep.subr.mxu0 0.0
    %205 = vmatpush1.msra.mxu0 %v188
    %206 = vmatprep.subr.mxu0 0.0
    %207 = vmatpush1.msra.mxu0 %v189
    %208 = vmatprep.subr.mxu0 0.0
    %209 = vmatpush1.msra.mxu0 %v190
    %210 = vmatprep.subr.mxu0 0.0
    %211 = vmatpush1.msra.mxu0 0.0
    %212 = vmatprep.subr.mxu0 0.0
    %213 = vmatpush1.msra.mxu0 0.0
    %214 = vmatprep.subr.mxu0 0.0
    %215 = vmatpush1.msra.mxu0 0.0
    %216 = vmatprep.subr.mxu0 0.0
    %217 = vmatpush1.msra.mxu0 0.0
    %218 = vmatprep.subr.mxu0 0.0
    %219 = vmatpush1.msra.mxu0 0.0
    %220 = vmatprep.subr.mxu0 0.0
    %221 = vmatpush1.msra.mxu0 0.0
    %222 = vmatprep.subr.mxu0 0.0
    %223 = vmatpush1.msra.mxu0 0.0
    %224 = vmatprep.subr.mxu0 0.0
    %225 = vmatpush1.msra.mxu0 0.0
    %226 = vmatprep.subr.mxu0 0.0
    %227 = vmatpush1.msra.mxu0 0.0
    %228 = vmatprep.subr.mxu0 0.0
    %229 = vmatpush1.msra.mxu0 0.0
    %230 = vmatprep.subr.mxu0 0.0
    %231 = vmatpush1.msra.mxu0 0.0
    %232 = vmatprep.subr.mxu0 0.0
    %233 = vmatpush1.msra.mxu0 0.0
    %234 = vmatprep.subr.mxu0 0.0
    %235 = vmatpush1.msra.mxu0 0.0
    %236 = vmatprep.subr.mxu0 0.0
    %237 = vmatpush1.msra.mxu0 0.0
    %238 = vmatprep.subr.mxu0 0.0
    %239 = vmatpush1.msra.mxu0 0.0
    %240 = vmatprep.subr.mxu0 0.0
    %241 = vmatpush1.msra.mxu0 0.0
    %242 = vmatprep.subr.mxu0 0.0
    %243 = vmatpush1.msra.mxu0 0.0
    %244 = vmatprep.subr.mxu0 0.0
    %245 = vmatpush1.msra.mxu0 0.0
    %246 = vmatprep.subr.mxu0 0.0
    %247 = vmatpush1.msra.mxu0 0.0
    %248 = vmatprep.subr.mxu0 0.0
    %249 = vmatpush1.msra.mxu0 0.0
    %250 = vmatprep.subr.mxu0 0.0
    %251 = vmatpush1.msra.mxu0 0.0
    %252 = vmatprep.subr.mxu0 0.0
    %253 = vmatpush1.msra.mxu0 0.0
    %254 = vmatprep.subr.mxu0 0.0
    %255 = vmatpush1.msra.mxu0 0.0
    %256 = vmatprep.subr.mxu0 0.0
    %257 = vmatpush1.msra.mxu0 0.0
    %258 = vmatprep.mubr.f32.mxu0 0.0
    %259 = vmatmul.mubr.f32.gmra.mrb[0].mxu0 %v192
    %v260 = vpop.f32.mrb[0].mxu0
    %v261 = vadd.f32 0.0, %v260
    %v262 = vpop.f32.mrb[0].mxu0
    %263 = vdwg.mxu0
    %v265 = vsel %vm152, %v182, 0
    %267 = vmatprep.subr.mxu0 0.0
    %268 = vmatpush1.msra.mxu0 %v183
    %269 = vmatprep.subr.mxu0 0.0
    %270 = vmatpush1.msra.mxu0 %v184
    %271 = vmatprep.subr.mxu0 0.0
    %272 = vmatpush1.msra.mxu0 %v185
    %273 = vmatprep.subr.mxu0 0.0
    %274 = vmatpush1.msra.mxu0 %v186
    %275 = vmatprep.subr.mxu0 0.0
    %276 = vmatpush1.msra.mxu0 %v187
    %277 = vmatprep.subr.mxu0 0.0
    %278 = vmatpush1.msra.mxu0 %v188
    %279 = vmatprep.subr.mxu0 0.0
    %280 = vmatpush1.msra.mxu0 %v189
    %281 = vmatprep.subr.mxu0 0.0
    %282 = vmatpush1.msra.mxu0 %v190
    %283 = vmatprep.subr.mxu0 0.0
    %284 = vmatpush1.msra.mxu0 0.0
    %285 = vmatprep.subr.mxu0 0.0
    %286 = vmatpush1.msra.mxu0 0.0
    %287 = vmatprep.subr.mxu0 0.0
    %288 = vmatpush1.msra.mxu0 0.0
    %289 = vmatprep.subr.mxu0 0.0
    %290 = vmatpush1.msra.mxu0 0.0
    %291 = vmatprep.subr.mxu0 0.0
    %292 = vmatpush1.msra.mxu0 0.0
    %293 = vmatprep.subr.mxu0 0.0
    %294 = vmatpush1.msra.mxu0 0.0
    %295 = vmatprep.subr.mxu0 0.0
    %296 = vmatpush1.msra.mxu0 0.0
    %297 = vmatprep.subr.mxu0 0.0
    %298 = vmatpush1.msra.mxu0 0.0
    %299 = vmatprep.subr.mxu0 0.0
    %300 = vmatpush1.msra.mxu0 0.0
    %301 = vmatprep.subr.mxu0 0.0
    %302 = vmatpush1.msra.mxu0 0.0
    %303 = vmatprep.subr.mxu0 0.0
    %304 = vmatpush1.msra.mxu0 0.0
    %305 = vmatprep.subr.mxu0 0.0
    %306 = vmatpush1.msra.mxu0 0.0
    %307 = vmatprep.subr.mxu0 0.0
    %308 = vmatpush1.msra.mxu0 0.0
    %309 = vmatprep.subr.mxu0 0.0
    %310 = vmatpush1.msra.mxu0 0.0
    %311 = vmatprep.subr.mxu0 0.0
    %312 = vmatpush1.msra.mxu0 0.0
    %313 = vmatprep.subr.mxu0 0.0
    %314 = vmatpush1.msra.mxu0 0.0
    %315 = vmatprep.subr.mxu0 0.0
    %316 = vmatpush1.msra.mxu0 0.0
    %317 = vmatprep.subr.mxu0 0.0
    %318 = vmatpush1.msra.mxu0 0.0
    %319 = vmatprep.subr.mxu0 0.0
    %320 = vmatpush1.msra.mxu0 0.0
    %321 = vmatprep.subr.mxu0 0.0
    %322 = vmatpush1.msra.mxu0 0.0
    %323 = vmatprep.subr.mxu0 0.0
    %324 = vmatpush1.msra.mxu0 0.0
    %325 = vmatprep.subr.mxu0 0.0
    %326 = vmatpush1.msra.mxu0 0.0
    %327 = vmatprep.subr.mxu0 0.0
    %328 = vmatpush1.msra.mxu0 0.0
    %329 = vmatprep.subr.mxu0 0.0
    %330 = vmatpush1.msra.mxu0 0.0
    %331 = vmatprep.mubr.f32.mxu0 0.0
    %332 = vmatmul.mubr.f32.gmra.mrb[0].mxu0 %v265
    %v333 = vpop.f32.mrb[0].mxu0
    %v334 = vadd.f32 0.0, %v333
    %v335 = vpop.f32.mrb[0].mxu0
    %336 = vdwg.mxu0
    %v337 = vmul.f32 %v261, %v261
    %v338 = vsub.f32 %v334, %v337
    %v339 = vadd.f32 %v338, 1e-05
    %v340 = vrsqrt.pop %v339
    %v341 = vld [vmem:[%s7] ss:$0 sm:$0xff]
    %v342 = vld [vmem:[%s7 + $0x1] ss:$0 sm:$0xff]
    %v343 = vld [vmem:[%s7 + $0x7] ss:$0 sm:$0xff]
    %v344 = vmul.f32 %v340, %v341
    %v345 = vsub.f32 1.0, %v343
    %v346 = vadd.f32 %v344, %v345
    %v347 = vlaneseq
    %v348 = vshrl.u32 %v347, 7
    %v349 = vsub.s32 0, %v348
    %v350 = vrot.slane %v261, %v349
    %v351 = vsub.f32 %v71, %v350
    %v352 = vsub.f32 %v72, %v350
    %v353 = vsub.f32 %v73, %v350
    %v354 = vsub.f32 %v74, %v350
    %v355 = vlaneseq
    %v356 = vshrl.u32 %v355, 7
    %v357 = vsub.s32 0, %v356
    %v358 = vrot.slane %v346, %v357
    %v359 = vmul.f32 %v351, %v358
    %v360 = vmul.f32 %v352, %v358
    %v361 = vmul.f32 %v353, %v358
    %v362 = vmul.f32 %v354, %v358
    %v363 = vadd.f32 %v359, %v342
    %v364 = vadd.f32 %v360, %v342
    %v365 = vadd.f32 %v361, %v342
    %v366 = vadd.f32 %v362, %v342
    %v367 = vxor.u32 %v363, 2147483648
    %v368 = vxor.u32 %v364, 2147483648
    %v369 = vxor.u32 %v365, 2147483648
    %v370 = vxor.u32 %v366, 2147483648
    %v371 = vmul.f32 %v367, 1.442695
    %v372 = vpow.pop %v371
    %v373 = vmul.f32 %v368, 1.442695
    %v374 = vpow.pop %v373
    %v375 = vmul.f32 %v369, 1.442695
    %v376 = vpow.pop %v375
    %v377 = vmul.f32 %v370, 1.442695
    %v378 = vpow.pop %v377
    %v379 = vadd.f32 %v372, 1.0
    %v380 = vadd.f32 %v374, 1.0
    %v381 = vadd.f32 %v376, 1.0
    %v382 = vadd.f32 %v378, 1.0
    %v383 = vrcp.pop %v379
    %v384 = vmul.f32 1.0, %v383
    %v385 = vrcp.pop %v380
    %v386 = vmul.f32 1.0, %v385
    %v387 = vrcp.pop %v381
    %v388 = vmul.f32 1.0, %v387
    %v389 = vrcp.pop %v382
    %v390 = vmul.f32 1.0, %v389
    %v391 = vmul.f32 %v343, %v384
    %v392 = vmul.f32 %v343, %v386
    %v393 = vmul.f32 %v343, %v388
    %v394 = vmul.f32 %v343, %v390
    %v395 = vadd.f32 %v391, %v345
    %v396 = vadd.f32 %v392, %v345
    %v397 = vadd.f32 %v393, %v345
    %v398 = vadd.f32 %v394, %v345
    %v399 = vmul.f32 %v363, %v395
    %v400 = vmul.f32 %v364, %v396
    %v401 = vmul.f32 %v365, %v397
    %v402 = vmul.f32 %v366, %v398
    %v403 = vrot.slane %v399, 7
    %v404 = vrot.slane %v400, 7
    %v405 = vrot.slane %v401, 7
    %v406 = vrot.slane %v402, 7
    %vm407 = vcmp.lt.s32.totalorder %v76, 1
    %v408 = vsel %vm407, %v405, %v406
    %v409 = vsel %vm407, %v404, %v405
    %v410 = vsel %vm407, %v403, %v404
    %v411 = vsel %vm407, %v406, %v403
    %v412 = vmul.f32 %v411, %v136
    %v413 = vmul.f32 %v410, %v137
    %v414 = vmul.f32 %v409, %v138
    %v415 = vmul.f32 %v408, %v139
    %v416 = vrot.slane %v399, 1
    %v417 = vrot.slane %v400, 1
    %v418 = vrot.slane %v401, 1
    %v419 = vrot.slane %v402, 1
    %vm420 = vcmp.lt.s32.totalorder %v76, 7
    %v421 = vsel %vm420, %v418, %v419
    %v422 = vsel %vm420, %v417, %v418
    %v423 = vsel %vm420, %v416, %v417
    %v424 = vsel %vm420, %v419, %v416
    %v425 = vmul.f32 %v423, %v148
    %v426 = vmul.f32 %v422, %v149
    %v427 = vmul.f32 %v421, %v150
    %v428 = vmul.f32 %v424, %v151
    %v429 = vpack.c.bf16 %v413, %v412
    %v430 = vpack.c.bf16 %v400, %v399
    %v431 = vpack.c.bf16 %v426, %v425
    %v432 = vpack.c.bf16 %v415, %v414
    %v433 = vpack.c.bf16 %v402, %v401
    %v434 = vpack.c.bf16 %v428, %v427
    %v435 = vld [vmem:[%s2] sm:$0xff]
    %v436 = vld [vmem:[%s2 + $0x8] sm:$0xff]
    %v437 = vld [vmem:[%s2 + $0x10] sm:$0xff]
    %v438 = vld [vmem:[%s2 + $0x18] sm:$0xff]
    %v439 = vld [vmem:[%s2 + $0x20] sm:$0xff]
    %v440 = vld [vmem:[%s2 + $0x28] sm:$0xff]
    %v441 = vld [vmem:[%s2 + $0x30] sm:$0xff]
    %v442 = vld [vmem:[%s2 + $0x38] sm:$0xff]
    %v443 = vld [vmem:[%s2 + $0x40] sm:$0xff]
    %v444 = vld [vmem:[%s2 + $0x48] sm:$0xff]
    %v445 = vld [vmem:[%s2 + $0x50] sm:$0xff]
    %v446 = vld [vmem:[%s2 + $0x58] sm:$0xff]
    %v447 = vld [vmem:[%s2 + $0x60] sm:$0xff]
    %v448 = vld [vmem:[%s2 + $0x68] sm:$0xff]
    %v449 = vld [vmem:[%s2 + $0x70] sm:$0xff]
    %v450 = vld [vmem:[%s2 + $0x78] sm:$0xff]
    %v451 = vld [vmem:[%s2 + $0x80] sm:$0xff]
    %v452 = vld [vmem:[%s2 + $0x88] sm:$0xff]
    %v453 = vld [vmem:[%s2 + $0x90] sm:$0xff]
    %v454 = vld [vmem:[%s2 + $0x98] sm:$0xff]
    %v455 = vld [vmem:[%s2 + $0xa0] sm:$0xff]
    %v456 = vld [vmem:[%s2 + $0xa8] sm:$0xff]
    %v457 = vld [vmem:[%s2 + $0xb0] sm:$0xff]
    %v458 = vld [vmem:[%s2 + $0xb8] sm:$0xff]
    %v459 = vld [vmem:[%s2 + $0xc0] sm:$0xff]
    %v460 = vld [vmem:[%s2 + $0xc8] sm:$0xff]
    %v461 = vld [vmem:[%s2 + $0xd0] sm:$0xff]
    %v462 = vld [vmem:[%s2 + $0xd8] sm:$0xff]
    %v463 = vld [vmem:[%s2 + $0xe0] sm:$0xff]
    %v464 = vld [vmem:[%s2 + $0xe8] sm:$0xff]
    %v465 = vld [vmem:[%s2 + $0xf0] sm:$0xff]
    %v466 = vld [vmem:[%s2 + $0xf8] sm:$0xff]
    %v467 = vld [vmem:[%s2 + $0x100] sm:$0xff]
    %v468 = vld [vmem:[%s2 + $0x108] sm:$0xff]
    %v469 = vld [vmem:[%s2 + $0x110] sm:$0xff]
    %v470 = vld [vmem:[%s2 + $0x118] sm:$0xff]
    %v471 = vld [vmem:[%s2 + $0x120] sm:$0xff]
    %v472 = vld [vmem:[%s2 + $0x128] sm:$0xff]
    %v473 = vld [vmem:[%s2 + $0x130] sm:$0xff]
    %v474 = vld [vmem:[%s2 + $0x138] sm:$0xff]
    %v475 = vld [vmem:[%s2 + $0x140] sm:$0xff]
    %v476 = vld [vmem:[%s2 + $0x148] sm:$0xff]
    %v477 = vld [vmem:[%s2 + $0x150] sm:$0xff]
    %v478 = vld [vmem:[%s2 + $0x158] sm:$0xff]
    %v479 = vld [vmem:[%s2 + $0x160] sm:$0xff]
    %v480 = vld [vmem:[%s2 + $0x168] sm:$0xff]
    %v481 = vld [vmem:[%s2 + $0x170] sm:$0xff]
    %v482 = vld [vmem:[%s2 + $0x178] sm:$0xff]
    %s483 = scalar_lea.vmem %s7, 4
    %v484 = vld [vmem:[%s483] ss:$8 sm:$0x3]
    %v486 = vlaneseq
    %v487 = vshrl.u32 %v486, 7
    %v488 = vsub.s32 0, %v487
    %v489 = vrot.slane %v484, %v488
    %v490 = vlaneseq
    %v491 = vshrl.u32 %v490, 7
    %v492 = vsub.s32 1, %v491
    %v493 = vrot.slane %v484, %v492
    %v544 = vunpack.c.l.b16 %v435
    %v545 = vunpack.c.h.b16 %v435
    %v546 = vunpack.c.l.b16 %v436
    %v547 = vunpack.c.h.b16 %v436
    %v548 = vunpack.c.l.b16 %v437
    %v549 = vunpack.c.h.b16 %v437
    %v550 = vunpack.c.l.b16 %v438
    %v551 = vunpack.c.h.b16 %v438
    %v552 = vunpack.c.l.b16 %v439
    %v553 = vunpack.c.h.b16 %v439
    %v554 = vunpack.c.l.b16 %v440
    %v555 = vunpack.c.h.b16 %v440
    %v556 = vunpack.c.l.b16 %v441
    %v557 = vunpack.c.h.b16 %v441
    %v558 = vunpack.c.l.b16 %v442
    %v559 = vunpack.c.h.b16 %v442
    %v560 = vunpack.c.l.b16 %v443
    %v561 = vunpack.c.h.b16 %v443
    %v562 = vunpack.c.l.b16 %v444
    %v563 = vunpack.c.h.b16 %v444
    %v564 = vunpack.c.l.b16 %v445
    %v565 = vunpack.c.h.b16 %v445
    %v566 = vunpack.c.l.b16 %v446
    %v567 = vunpack.c.h.b16 %v446
    %v568 = vunpack.c.l.b16 %v447
    %v569 = vunpack.c.h.b16 %v447
    %v570 = vunpack.c.l.b16 %v448
    %v571 = vunpack.c.h.b16 %v448
    %v572 = vunpack.c.l.b16 %v449
    %v573 = vunpack.c.h.b16 %v449
    %v574 = vunpack.c.l.b16 %v450
    %v575 = vunpack.c.h.b16 %v450
    %v576 = vunpack.c.l.b16 %v451
    %v577 = vunpack.c.h.b16 %v451
    %v578 = vunpack.c.l.b16 %v452
    %v579 = vunpack.c.h.b16 %v452
    %v580 = vunpack.c.l.b16 %v453
    %v581 = vunpack.c.h.b16 %v453
    %v582 = vunpack.c.l.b16 %v454
    %v583 = vunpack.c.h.b16 %v454
    %v584 = vunpack.c.l.b16 %v455
    %v585 = vunpack.c.h.b16 %v455
    %v586 = vunpack.c.l.b16 %v456
    %v587 = vunpack.c.h.b16 %v456
    %v588 = vunpack.c.l.b16 %v457
    %v589 = vunpack.c.h.b16 %v457
    %v590 = vunpack.c.l.b16 %v458
    %v591 = vunpack.c.h.b16 %v458
    %v592 = vunpack.c.l.b16 %v459
    %v593 = vunpack.c.h.b16 %v459
    %v594 = vunpack.c.l.b16 %v460
    %v595 = vunpack.c.h.b16 %v460
    %v596 = vunpack.c.l.b16 %v461
    %v597 = vunpack.c.h.b16 %v461
    %v598 = vunpack.c.l.b16 %v462
    %v599 = vunpack.c.h.b16 %v462
    %v600 = vunpack.c.l.b16 %v463
    %v601 = vunpack.c.h.b16 %v463
    %v602 = vunpack.c.l.b16 %v464
    %v603 = vunpack.c.h.b16 %v464
    %v604 = vunpack.c.l.b16 %v465
    %v605 = vunpack.c.h.b16 %v465
    %v606 = vunpack.c.l.b16 %v466
    %v607 = vunpack.c.h.b16 %v466
    %v608 = vunpack.c.l.b16 %v467
    %v609 = vunpack.c.h.b16 %v467
    %v610 = vunpack.c.l.b16 %v468
    %v611 = vunpack.c.h.b16 %v468
    %v612 = vunpack.c.l.b16 %v469
    %v613 = vunpack.c.h.b16 %v469
    %v614 = vunpack.c.l.b16 %v470
    %v615 = vunpack.c.h.b16 %v470
    %v616 = vunpack.c.l.b16 %v471
    %v617 = vunpack.c.h.b16 %v471
    %v618 = vunpack.c.l.b16 %v472
    %v619 = vunpack.c.h.b16 %v472
    %v620 = vunpack.c.l.b16 %v473
    %v621 = vunpack.c.h.b16 %v473
    %v622 = vunpack.c.l.b16 %v474
    %v623 = vunpack.c.h.b16 %v474
    %v624 = vunpack.c.l.b16 %v475
    %v625 = vunpack.c.h.b16 %v475
    %v626 = vunpack.c.l.b16 %v476
    %v627 = vunpack.c.h.b16 %v476
    %v628 = vunpack.c.l.b16 %v477
    %v629 = vunpack.c.h.b16 %v477
    %v630 = vunpack.c.l.b16 %v478
    %v631 = vunpack.c.h.b16 %v478
    %v632 = vunpack.c.l.b16 %v479
    %v633 = vunpack.c.h.b16 %v479
    %v634 = vunpack.c.l.b16 %v480
    %v635 = vunpack.c.h.b16 %v480
    %v636 = vunpack.c.l.b16 %v481
    %v637 = vunpack.c.h.b16 %v481
    %v638 = vunpack.c.l.b16 %v482
    %v639 = vunpack.c.h.b16 %v482
    %v640 = vpack.c.b16 %v546, %v544
    %v641 = vpack.c.b16 %v547, %v545
    %v642 = vpack.c.b16 %v550, %v548
    %v643 = vpack.c.b16 %v551, %v549
    %v644 = vpack.c.b16 %v554, %v552
    %v645 = vpack.c.b16 %v555, %v553
    %v646 = vpack.c.b16 %v558, %v556
    %v647 = vpack.c.b16 %v559, %v557
    %v648 = vpack.c.b16 %v562, %v560
    %v649 = vpack.c.b16 %v563, %v561
    %v650 = vpack.c.b16 %v566, %v564
    %v651 = vpack.c.b16 %v567, %v565
    %v652 = vpack.c.b16 %v570, %v568
    %v653 = vpack.c.b16 %v571, %v569
    %v654 = vpack.c.b16 %v574, %v572
    %v655 = vpack.c.b16 %v575, %v573
    %v656 = vpack.c.b16 %v578, %v576
    %v657 = vpack.c.b16 %v579, %v577
    %v658 = vpack.c.b16 %v582, %v580
    %v659 = vpack.c.b16 %v583, %v581
    %v660 = vpack.c.b16 %v586, %v584
    %v661 = vpack.c.b16 %v587, %v585
    %v662 = vpack.c.b16 %v590, %v588
    %v663 = vpack.c.b16 %v591, %v589
    %v664 = vpack.c.b16 %v594, %v592
    %v665 = vpack.c.b16 %v595, %v593
    %v666 = vpack.c.b16 %v598, %v596
    %v667 = vpack.c.b16 %v599, %v597
    %v668 = vpack.c.b16 %v602, %v600
    %v669 = vpack.c.b16 %v603, %v601
    %v670 = vpack.c.b16 %v606, %v604
    %v671 = vpack.c.b16 %v607, %v605
    %v672 = vpack.c.b16 %v610, %v608
    %v673 = vpack.c.b16 %v611, %v609
    %v674 = vpack.c.b16 %v614, %v612
    %v675 = vpack.c.b16 %v615, %v613
    %v676 = vpack.c.b16 %v618, %v616
    %v677 = vpack.c.b16 %v619, %v617
    %v678 = vpack.c.b16 %v622, %v620
    %v679 = vpack.c.b16 %v623, %v621
    %v680 = vpack.c.b16 %v626, %v624
    %v681 = vpack.c.b16 %v627, %v625
    %v682 = vpack.c.b16 %v630, %v628
    %v683 = vpack.c.b16 %v631, %v629
    %v684 = vpack.c.b16 %v634, %v632
    %v685 = vpack.c.b16 %v635, %v633
    %v686 = vpack.c.b16 %v638, %v636
    %v687 = vpack.c.b16 %v639, %v637
    %736 = vmatprep.subr.bf16.mxu0 %v641
    %737 = vmatpush1.bf16.msra.mxu0 %v640
    %738 = vmatprep.subr.bf16.mxu0 %v643
    %739 = vmatpush1.bf16.msra.mxu0 %v642
    %740 = vmatprep.subr.bf16.mxu0 %v645
    %741 = vmatpush1.bf16.msra.mxu0 %v644
    %742 = vmatprep.subr.bf16.mxu0 %v647
    %743 = vmatpush1.bf16.msra.mxu0 %v646
    %744 = vmatprep.subr.bf16.mxu0 %v649
    %745 = vmatpush1.bf16.msra.mxu0 %v648
    %746 = vmatprep.subr.bf16.mxu0 %v651
    %747 = vmatpush1.bf16.msra.mxu0 %v650
    %748 = vmatprep.subr.bf16.mxu0 %v653
    %749 = vmatpush1.bf16.msra.mxu0 %v652
    %750 = vmatprep.subr.bf16.mxu0 %v655
    %751 = vmatpush1.bf16.msra.mxu0 %v654
    %752 = vmatprep.subr.bf16.mxu0 %v657
    %753 = vmatpush1.bf16.msra.mxu0 %v656
    %754 = vmatprep.subr.bf16.mxu0 %v659
    %755 = vmatpush1.bf16.msra.mxu0 %v658
    %756 = vmatprep.subr.bf16.mxu0 %v661
    %757 = vmatpush1.bf16.msra.mxu0 %v660
    %758 = vmatprep.subr.bf16.mxu0 %v663
    %759 = vmatpush1.bf16.msra.mxu0 %v662
    %760 = vmatprep.subr.bf16.mxu0 %v665
    %761 = vmatpush1.bf16.msra.mxu0 %v664
    %762 = vmatprep.subr.bf16.mxu0 %v667
    %763 = vmatpush1.bf16.msra.mxu0 %v666
    %764 = vmatprep.subr.bf16.mxu0 %v669
    %765 = vmatpush1.bf16.msra.mxu0 %v668
    %766 = vmatprep.subr.bf16.mxu0 %v671
    %767 = vmatpush1.bf16.msra.mxu0 %v670
    %768 = vmatprep.mubr.bf16.mxu0 %v430
    %769 = vmatmul.mubr.bf16.gmra.mrb[0].mxu0 %v429
    %v770 = vpop.f32.mrb[0].mxu0
    %v771 = vadd.f32 %v489, %v770
    %v772 = vpop.f32.mrb[0].mxu0
    %v773 = vadd.f32 %v493, %v772
    %v774 = vpop.f32.mrb[0].mxu0
    %v775 = vadd.f32 %v489, %v774
    %v776 = vpop.f32.mrb[0].mxu0
    %v777 = vadd.f32 %v493, %v776
    %778 = vmatprep.mubr.bf16.mxu0 %v433
    %779 = vmatmul.mubr.bf16.gmra.mrb[0].mxu0 %v432
    %v780 = vpop.f32.mrb[0].mxu0
    %v781 = vadd.f32 %v489, %v780
    %v782 = vpop.f32.mrb[0].mxu0
    %v783 = vadd.f32 %v493, %v782
    %v784 = vpop.f32.mrb[0].mxu0
    %v785 = vadd.f32 %v489, %v784
    %v786 = vpop.f32.mrb[0].mxu0
    %v787 = vadd.f32 %v493, %v786
    %788 = vdwg.mxu0
    %789 = vmatprep.subr.bf16.mxu0 %v673
    %790 = vmatpush1.bf16.msra.mxu0 %v672
    %791 = vmatprep.subr.bf16.mxu0 %v675
    %792 = vmatpush1.bf16.msra.mxu0 %v674
    %793 = vmatprep.subr.bf16.mxu0 %v677
    %794 = vmatpush1.bf16.msra.mxu0 %v676
    %795 = vmatprep.subr.bf16.mxu0 %v679
    %796 = vmatpush1.bf16.msra.mxu0 %v678
    %797 = vmatprep.subr.bf16.mxu0 %v681
    %798 = vmatpush1.bf16.msra.mxu0 %v680
    %799 = vmatprep.subr.bf16.mxu0 %v683
    %800 = vmatpush1.bf16.msra.mxu0 %v682
    %801 = vmatprep.subr.bf16.mxu0 %v685
    %802 = vmatpush1.bf16.msra.mxu0 %v684
    %803 = vmatprep.subr.bf16.mxu0 %v687
    %804 = vmatpush1.bf16.msra.mxu0 %v686
    %805 = vmatprep.subr.bf16.mxu0 0
    %806 = vmatpush1.bf16.msra.mxu0 0
    %807 = vmatprep.subr.bf16.mxu0 0
    %808 = vmatpush1.bf16.msra.mxu0 0
    %809 = vmatprep.subr.bf16.mxu0 0
    %810 = vmatpush1.bf16.msra.mxu0 0
    %811 = vmatprep.subr.bf16.mxu0 0
    %812 = vmatpush1.bf16.msra.mxu0 0
    %813 = vmatprep.subr.bf16.mxu0 0
    %814 = vmatpush1.bf16.msra.mxu0 0
    %815 = vmatprep.subr.bf16.mxu0 0
    %816 = vmatpush1.bf16.msra.mxu0 0
    %817 = vmatprep.subr.bf16.mxu0 0
    %818 = vmatpush1.bf16.msra.mxu0 0
    %819 = vmatprep.subr.bf16.mxu0 0
    %820 = vmatpush1.bf16.msra.mxu0 0
    %821 = vmatprep.mubr.bf16.mxu0 0
    %822 = vmatmul.mubr.bf16.gmra.mrb[0].mxu0 %v431
    %v823 = vpop.f32.mrb[0].mxu0
    %v824 = vadd.f32 %v771, %v823
    %v825 = vpop.f32.mrb[0].mxu0
    %v826 = vadd.f32 %v773, %v825
    %v827 = vpop.f32.mrb[0].mxu0
    %v828 = vadd.f32 %v775, %v827
    %v829 = vpop.f32.mrb[0].mxu0
    %v830 = vadd.f32 %v777, %v829
    %831 = vmatprep.mubr.bf16.mxu0 0
    %832 = vmatmul.mubr.bf16.gmra.mrb[0].mxu0 %v434
    %v833 = vpop.f32.mrb[0].mxu0
    %v834 = vadd.f32 %v781, %v833
    %v835 = vpop.f32.mrb[0].mxu0
    %v836 = vadd.f32 %v783, %v835
    %v837 = vpop.f32.mrb[0].mxu0
    %v838 = vadd.f32 %v785, %v837
    %v839 = vpop.f32.mrb[0].mxu0
    %v840 = vadd.f32 %v787, %v839
    %841 = vdwg.mxu0
    %v842 = vld [vmem:[%s1] sm:$0x3]
    %v843 = vxor.u32 %v842, 2147483648
    %v844 = vmul.f32 %v843, 1.442695
    %v845 = vpow.pop %v844
    %v846 = vadd.f32 %v845, 1.0
    %v847 = vrcp.pop %v846
    %v848 = vmul.f32 1.0, %v847
    %v849 = vmul.f32 %v842, %v848
    %v850 = vld [vmem:[#allocation6] sm:$0xff]
    %v851 = vld [vmem:[#allocation6 + $0x8] sm:$0xff]
    %v852 = vld [vmem:[#allocation6 + $0x10] sm:$0xff]
    %v853 = vld [vmem:[#allocation6 + $0x18] sm:$0xff]
    %v854 = vld [vmem:[#allocation6 + $0x20] sm:$0xff]
    %v855 = vld [vmem:[#allocation6 + $0x28] sm:$0xff]
    %v856 = vld [vmem:[#allocation6 + $0x30] sm:$0xff]
    %v857 = vld [vmem:[#allocation6 + $0x38] sm:$0xff]
    %s858 = scalar_lea.vmem %s7, 6
    %v859 = vld [vmem:[%s858] ss:$8 sm:$0x3]
    %v861 = vlaneseq
    %v862 = vshrl.u32 %v861, 7
    %v863 = vsub.s32 0, %v862
    %v864 = vrot.slane %v859, %v863
    %v865 = vlaneseq
    %v866 = vshrl.u32 %v865, 7
    %v867 = vsub.s32 1, %v866
    %v868 = vrot.slane %v859, %v867
    %vm871 = vcmask 261120
    %v873 = vsel %vm871, %v849, 0
    %875 = vmatprep.subr.mxu0 %v851
    %876 = vmatpush1.msra.mxu0 %v850
    %877 = vmatprep.subr.mxu0 %v853
    %878 = vmatpush1.msra.mxu0 %v852
    %879 = vmatprep.subr.mxu0 %v855
    %880 = vmatpush1.msra.mxu0 %v854
    %881 = vmatprep.subr.mxu0 %v857
    %882 = vmatpush1.msra.mxu0 %v856
    %883 = vmatprep.subr.mxu0 0.0
    %884 = vmatpush1.msra.mxu0 0.0
    %885 = vmatprep.subr.mxu0 0.0
    %886 = vmatpush1.msra.mxu0 0.0
    %887 = vmatprep.subr.mxu0 0.0
    %888 = vmatpush1.msra.mxu0 0.0
    %889 = vmatprep.subr.mxu0 0.0
    %890 = vmatpush1.msra.mxu0 0.0
    %891 = vmatprep.subr.mxu0 0.0
    %892 = vmatpush1.msra.mxu0 0.0
    %893 = vmatprep.subr.mxu0 0.0
    %894 = vmatpush1.msra.mxu0 0.0
    %895 = vmatprep.subr.mxu0 0.0
    %896 = vmatpush1.msra.mxu0 0.0
    %897 = vmatprep.subr.mxu0 0.0
    %898 = vmatpush1.msra.mxu0 0.0
    %899 = vmatprep.subr.mxu0 0.0
    %900 = vmatpush1.msra.mxu0 0.0
    %901 = vmatprep.subr.mxu0 0.0
    %902 = vmatpush1.msra.mxu0 0.0
    %903 = vmatprep.subr.mxu0 0.0
    %904 = vmatpush1.msra.mxu0 0.0
    %905 = vmatprep.subr.mxu0 0.0
    %906 = vmatpush1.msra.mxu0 0.0
    %907 = vmatprep.subr.mxu0 0.0
    %908 = vmatpush1.msra.mxu0 0.0
    %909 = vmatprep.subr.mxu0 0.0
    %910 = vmatpush1.msra.mxu0 0.0
    %911 = vmatprep.subr.mxu0 0.0
    %912 = vmatpush1.msra.mxu0 0.0
    %913 = vmatprep.subr.mxu0 0.0
    %914 = vmatpush1.msra.mxu0 0.0
    %915 = vmatprep.subr.mxu0 0.0
    %916 = vmatpush1.msra.mxu0 0.0
    %917 = vmatprep.subr.mxu0 0.0
    %918 = vmatpush1.msra.mxu0 0.0
    %919 = vmatprep.subr.mxu0 0.0
    %920 = vmatpush1.msra.mxu0 0.0
    %921 = vmatprep.subr.mxu0 0.0
    %922 = vmatpush1.msra.mxu0 0.0
    %923 = vmatprep.subr.mxu0 0.0
    %924 = vmatpush1.msra.mxu0 0.0
    %925 = vmatprep.subr.mxu0 0.0
    %926 = vmatpush1.msra.mxu0 0.0
    %927 = vmatprep.subr.mxu0 0.0
    %928 = vmatpush1.msra.mxu0 0.0
    %929 = vmatprep.subr.mxu0 0.0
    %930 = vmatpush1.msra.mxu0 0.0
    %931 = vmatprep.subr.mxu0 0.0
    %932 = vmatpush1.msra.mxu0 0.0
    %933 = vmatprep.subr.mxu0 0.0
    %934 = vmatpush1.msra.mxu0 0.0
    %935 = vmatprep.subr.mxu0 0.0
    %936 = vmatpush1.msra.mxu0 0.0
    %937 = vmatprep.subr.mxu0 0.0
    %938 = vmatpush1.msra.mxu0 0.0
    %939 = vmatprep.mubr.f32.mxu0 0.0
    %940 = vmatmul.mubr.f32.gmra.mrb[0].mxu0 %v873
    %v941 = vpop.f32.mrb[0].mxu0
    %v942 = vadd.f32 %v864, %v941
    %v943 = vpop.f32.mrb[0].mxu0
    %v944 = vadd.f32 %v868, %v943
    %945 = vdwg.mxu0
    %v946 = vlaneseq
    %v947 = vshrl.u32 %v946, 7
    %v948 = vsub.s32 0, %v947
    %v949 = vrot.slane %v942, %v948
    %v950 = vlaneseq
    %v951 = vshrl.u32 %v950, 7
    %v952 = vsub.s32 0, %v951
    %v953 = vrot.slane %v944, %v952
    %v954 = vlaneseq
    %v955 = vshrl.u32 %v954, 7
    %v956 = vsub.s32 1, %v955
    %v957 = vrot.slane %v942, %v956
    %v958 = vlaneseq
    %v959 = vshrl.u32 %v958, 7
    %v960 = vsub.s32 1, %v959
    %v961 = vrot.slane %v944, %v960
    %v962 = vmul.f32 %v949, %v824
    %v963 = vmul.f32 %v949, %v828
    %v964 = vmul.f32 %v957, %v834
    %v965 = vmul.f32 %v957, %v838
    %v966 = vadd.f32 %v824, %v962
    %v967 = vadd.f32 %v828, %v963
    %v968 = vadd.f32 %v834, %v964
    %v969 = vadd.f32 %v838, %v965
    %v970 = vadd.f32 %v966, %v953
    %v971 = vadd.f32 %v967, %v953
    %v972 = vadd.f32 %v968, %v961
    %v973 = vadd.f32 %v969, %v961
    %v974 = vadd.f32 %v970, %v971
    %v975 = vadd.f32 %v974, %v972
    %v976 = vadd.f32 %v975, %v973
    %v977 = vrot.slane %v976, 4
    %v978 = vadd.f32 %v976, %v977
    %v979 = vrot.slane %v978, 2
    %v980 = vadd.f32 %v978, %v979
    %v981 = vrot.slane %v980, 1
    %v982 = vadd.f32 %v980, %v981
    %v983 = vmul.f32 %v970, %v970
    %v984 = vmul.f32 %v971, %v971
    %v985 = vmul.f32 %v972, %v972
    %v986 = vmul.f32 %v973, %v973
    %v987 = vadd.f32 %v983, %v984
    %v988 = vadd.f32 %v987, %v985
    %v989 = vadd.f32 %v988, %v986
    %v990 = vrot.slane %v989, 4
    %v991 = vadd.f32 %v989, %v990
    %v992 = vrot.slane %v991, 2
    %v993 = vadd.f32 %v991, %v992
    %v994 = vrot.slane %v993, 1
    %v995 = vadd.f32 %v993, %v994
    %v996 = vld [vmem:[#allocation4] sm:$0xff]
    %v997 = vld [vmem:[#allocation4 + $0x8] sm:$0xff]
    %v998 = vld [vmem:[#allocation4 + $0x10] sm:$0xff]
    %v999 = vld [vmem:[#allocation4 + $0x18] sm:$0xff]
    %v1000 = vld [vmem:[#allocation4 + $0x20] sm:$0xff]
    %v1001 = vld [vmem:[#allocation4 + $0x28] sm:$0xff]
    %v1002 = vld [vmem:[#allocation4 + $0x30] sm:$0xff]
    %v1003 = vld [vmem:[#allocation4 + $0x38] sm:$0xff]
    %v1004 = vld [vmem:[#allocation4 + $0x40] sm:$0xff]
    %v1005 = vld [vmem:[#allocation4 + $0x48] sm:$0xff]
    %v1006 = vld [vmem:[#allocation4 + $0x50] sm:$0xff]
    %v1007 = vld [vmem:[#allocation4 + $0x58] sm:$0xff]
    %v1008 = vld [vmem:[#allocation4 + $0x60] sm:$0xff]
    %v1009 = vld [vmem:[#allocation4 + $0x68] sm:$0xff]
    %v1010 = vld [vmem:[#allocation4 + $0x70] sm:$0xff]
    %v1011 = vld [vmem:[#allocation4 + $0x78] sm:$0xff]
    %1012 = vmatprep.subr.mxu0 0.0
    %1013 = vmatpush1.msra.mxu0 %v996
    %1014 = vmatprep.subr.mxu0 0.0
    %1015 = vmatpush1.msra.mxu0 %v997
    %1016 = vmatprep.subr.mxu0 0.0
    %1017 = vmatpush1.msra.mxu0 %v998
    %1018 = vmatprep.subr.mxu0 0.0
    %1019 = vmatpush1.msra.mxu0 %v999
    %1020 = vmatprep.subr.mxu0 0.0
    %1021 = vmatpush1.msra.mxu0 %v1000
    %1022 = vmatprep.subr.mxu0 0.0
    %1023 = vmatpush1.msra.mxu0 %v1001
    %1024 = vmatprep.subr.mxu0 0.0
    %1025 = vmatpush1.msra.mxu0 %v1002
    %1026 = vmatprep.subr.mxu0 0.0
    %1027 = vmatpush1.msra.mxu0 %v1003
    %1028 = vmatprep.subr.mxu0 0.0
    %1029 = vmatpush1.msra.mxu0 %v1004
    %1030 = vmatprep.subr.mxu0 0.0
    %1031 = vmatpush1.msra.mxu0 %v1005
    %1032 = vmatprep.subr.mxu0 0.0
    %1033 = vmatpush1.msra.mxu0 %v1006
    %1034 = vmatprep.subr.mxu0 0.0
    %1035 = vmatpush1.msra.mxu0 %v1007
    %1036 = vmatprep.subr.mxu0 0.0
    %1037 = vmatpush1.msra.mxu0 %v1008
    %1038 = vmatprep.subr.mxu0 0.0
    %1039 = vmatpush1.msra.mxu0 %v1009
    %1040 = vmatprep.subr.mxu0 0.0
    %1041 = vmatpush1.msra.mxu0 %v1010
    %1042 = vmatprep.subr.mxu0 0.0
    %1043 = vmatpush1.msra.mxu0 %v1011
    %1044 = vmatprep.subr.mxu0 0.0
    %1045 = vmatpush1.msra.mxu0 0.0
    %1046 = vmatprep.subr.mxu0 0.0
    %1047 = vmatpush1.msra.mxu0 0.0
    %1048 = vmatprep.subr.mxu0 0.0
    %1049 = vmatpush1.msra.mxu0 0.0
    %1050 = vmatprep.subr.mxu0 0.0
    %1051 = vmatpush1.msra.mxu0 0.0
    %1052 = vmatprep.subr.mxu0 0.0
    %1053 = vmatpush1.msra.mxu0 0.0
    %1054 = vmatprep.subr.mxu0 0.0
    %1055 = vmatpush1.msra.mxu0 0.0
    %1056 = vmatprep.subr.mxu0 0.0
    %1057 = vmatpush1.msra.mxu0 0.0
    %1058 = vmatprep.subr.mxu0 0.0
    %1059 = vmatpush1.msra.mxu0 0.0
    %1060 = vmatprep.subr.mxu0 0.0
    %1061 = vmatpush1.msra.mxu0 0.0
    %1062 = vmatprep.subr.mxu0 0.0
    %1063 = vmatpush1.msra.mxu0 0.0
    %1064 = vmatprep.subr.mxu0 0.0
    %1065 = vmatpush1.msra.mxu0 0.0
    %1066 = vmatprep.subr.mxu0 0.0
    %1067 = vmatpush1.msra.mxu0 0.0
    %1068 = vmatprep.subr.mxu0 0.0
    %1069 = vmatpush1.msra.mxu0 0.0
    %1070 = vmatprep.subr.mxu0 0.0
    %1071 = vmatpush1.msra.mxu0 0.0
    %1072 = vmatprep.subr.mxu0 0.0
    %1073 = vmatpush1.msra.mxu0 0.0
    %1074 = vmatprep.subr.mxu0 0.0
    %1075 = vmatpush1.msra.mxu0 0.0
    %1076 = vmatprep.mubr.f32.mxu0 0.0
    %1077 = vmatmul.mubr.f32.gmra.mrb[0].mxu0 %v982
    %v1078 = vpop.f32.mrb[0].mxu0
    %v1079 = vadd.f32 0.0, %v1078
    %v1080 = vpop.f32.mrb[0].mxu0
    %1081 = vdwg.mxu0
    %1082 = vmatprep.subr.mxu0 0.0
    %1083 = vmatpush1.msra.mxu0 %v996
    %1084 = vmatprep.subr.mxu0 0.0
    %1085 = vmatpush1.msra.mxu0 %v997
    %1086 = vmatprep.subr.mxu0 0.0
    %1087 = vmatpush1.msra.mxu0 %v998
    %1088 = vmatprep.subr.mxu0 0.0
    %1089 = vmatpush1.msra.mxu0 %v999
    %1090 = vmatprep.subr.mxu0 0.0
    %1091 = vmatpush1.msra.mxu0 %v1000
    %1092 = vmatprep.subr.mxu0 0.0
    %1093 = vmatpush1.msra.mxu0 %v1001
    %1094 = vmatprep.subr.mxu0 0.0
    %1095 = vmatpush1.msra.mxu0 %v1002
    %1096 = vmatprep.subr.mxu0 0.0
    %1097 = vmatpush1.msra.mxu0 %v1003
    %1098 = vmatprep.subr.mxu0 0.0
    %1099 = vmatpush1.msra.mxu0 %v1004
    %1100 = vmatprep.subr.mxu0 0.0
    %1101 = vmatpush1.msra.mxu0 %v1005
    %1102 = vmatprep.subr.mxu0 0.0
    %1103 = vmatpush1.msra.mxu0 %v1006
    %1104 = vmatprep.subr.mxu0 0.0
    %1105 = vmatpush1.msra.mxu0 %v1007
    %1106 = vmatprep.subr.mxu0 0.0
    %1107 = vmatpush1.msra.mxu0 %v1008
    %1108 = vmatprep.subr.mxu0 0.0
    %1109 = vmatpush1.msra.mxu0 %v1009
    %1110 = vmatprep.subr.mxu0 0.0
    %1111 = vmatpush1.msra.mxu0 %v1010
    %1112 = vmatprep.subr.mxu0 0.0
    %1113 = vmatpush1.msra.mxu0 %v1011
    %1114 = vmatprep.subr.mxu0 0.0
    %1115 = vmatpush1.msra.mxu0 0.0
    %1116 = vmatprep.subr.mxu0 0.0
    %1117 = vmatpush1.msra.mxu0 0.0
    %1118 = vmatprep.subr.mxu0 0.0
    %1119 = vmatpush1.msra.mxu0 0.0
    %1120 = vmatprep.subr.mxu0 0.0
    %1121 = vmatpush1.msra.mxu0 0.0
    %1122 = vmatprep.subr.mxu0 0.0
    %1123 = vmatpush1.msra.mxu0 0.0
    %1124 = vmatprep.subr.mxu0 0.0
    %1125 = vmatpush1.msra.mxu0 0.0
    %1126 = vmatprep.subr.mxu0 0.0
    %1127 = vmatpush1.msra.mxu0 0.0
    %1128 = vmatprep.subr.mxu0 0.0
    %1129 = vmatpush1.msra.mxu0 0.0
    %1130 = vmatprep.subr.mxu0 0.0
    %1131 = vmatpush1.msra.mxu0 0.0
    %1132 = vmatprep.subr.mxu0 0.0
    %1133 = vmatpush1.msra.mxu0 0.0
    %1134 = vmatprep.subr.mxu0 0.0
    %1135 = vmatpush1.msra.mxu0 0.0
    %1136 = vmatprep.subr.mxu0 0.0
    %1137 = vmatpush1.msra.mxu0 0.0
    %1138 = vmatprep.subr.mxu0 0.0
    %1139 = vmatpush1.msra.mxu0 0.0
    %1140 = vmatprep.subr.mxu0 0.0
    %1141 = vmatpush1.msra.mxu0 0.0
    %1142 = vmatprep.subr.mxu0 0.0
    %1143 = vmatpush1.msra.mxu0 0.0
    %1144 = vmatprep.subr.mxu0 0.0
    %1145 = vmatpush1.msra.mxu0 0.0
    %1146 = vmatprep.mubr.f32.mxu0 0.0
    %1147 = vmatmul.mubr.f32.gmra.mrb[0].mxu0 %v995
    %v1148 = vpop.f32.mrb[0].mxu0
    %v1149 = vadd.f32 0.0, %v1148
    %v1150 = vpop.f32.mrb[0].mxu0
    %1151 = vdwg.mxu0
    %v1152 = vmul.f32 %v1079, %v1079
    %v1153 = vsub.f32 %v1149, %v1152
    %v1154 = vadd.f32 %v1153, 1e-05
    %v1155 = vrsqrt.pop %v1154
    %v1156 = vlaneseq
    %v1157 = vshrl.u32 %v1156, 7
    %v1158 = vsub.s32 0, %v1157
    %v1159 = vrot.slane %v1079, %v1158
    %v1160 = vsub.f32 %v970, %v1159
    %v1161 = vsub.f32 %v971, %v1159
    %v1162 = vsub.f32 %v972, %v1159
    %v1163 = vsub.f32 %v973, %v1159
    %v1164 = vld [vmem:[%s7 + $0x2] ss:$0 sm:$0xff]
    %v1165 = vmul.f32 %v1155, %v1164
    %v1166 = vlaneseq
    %v1167 = vshrl.u32 %v1166, 7
    %v1168 = vsub.s32 0, %v1167
    %v1169 = vrot.slane %v1165, %v1168
    %v1170 = vmul.f32 %v1160, %v1169
    %v1171 = vmul.f32 %v1161, %v1169
    %v1172 = vmul.f32 %v1162, %v1169
    %v1173 = vmul.f32 %v1163, %v1169
    %v1174 = vld [vmem:[%s7 + $0x3] ss:$0 sm:$0xff]
    %v1175 = vadd.f32 %v1170, %v1174
    %v1176 = vadd.f32 %v1171, %v1174
    %v1177 = vadd.f32 %v1172, %v1174
    %v1178 = vadd.f32 %v1173, %v1174
    %v1179 = vxor.u32 %v1175, 2147483648
    %v1180 = vxor.u32 %v1176, 2147483648
    %v1181 = vxor.u32 %v1177, 2147483648
    %v1182 = vxor.u32 %v1178, 2147483648
    %v1183 = vmul.f32 %v1179, 1.442695
    %v1184 = vpow.pop %v1183
    %v1185 = vmul.f32 %v1180, 1.442695
    %v1186 = vpow.pop %v1185
    %v1187 = vmul.f32 %v1181, 1.442695
    %v1188 = vpow.pop %v1187
    %v1189 = vmul.f32 %v1182, 1.442695
    %v1190 = vpow.pop %v1189
    %v1191 = vadd.f32 %v1184, 1.0
    %v1192 = vadd.f32 %v1186, 1.0
    %v1193 = vadd.f32 %v1188, 1.0
    %v1194 = vadd.f32 %v1190, 1.0
    %v1195 = vrcp.pop %v1191
    %v1196 = vmul.f32 1.0, %v1195
    %v1197 = vrcp.pop %v1192
    %v1198 = vmul.f32 1.0, %v1197
    %v1199 = vrcp.pop %v1193
    %v1200 = vmul.f32 1.0, %v1199
    %v1201 = vrcp.pop %v1194
    %v1202 = vmul.f32 1.0, %v1201
    %v1203 = vmul.f32 %v1175, %v1196
    %v1204 = vmul.f32 %v1176, %v1198
    %v1205 = vmul.f32 %v1177, %v1200
    %v1206 = vmul.f32 %v1178, %v1202
    %v1207 = vrot.slane %v1203, 7
    %v1208 = vrot.slane %v1204, 7
    %v1209 = vrot.slane %v1205, 7
    %v1210 = vrot.slane %v1206, 7
    %v1211 = vsel %vm407, %v1209, %v1210
    %v1212 = vsel %vm407, %v1208, %v1209
    %v1213 = vsel %vm407, %v1207, %v1208
    %v1214 = vsel %vm407, %v1210, %v1207
    %v1215 = vmul.f32 %v1214, %v136
    %v1216 = vmul.f32 %v1213, %v137
    %v1217 = vmul.f32 %v1212, %v138
    %v1218 = vmul.f32 %v1211, %v139
    %v1219 = vrot.slane %v1203, 1
    %v1220 = vrot.slane %v1204, 1
    %v1221 = vrot.slane %v1205, 1
    %v1222 = vrot.slane %v1206, 1
    %v1223 = vsel %vm420, %v1221, %v1222
    %v1224 = vsel %vm420, %v1220, %v1221
    %v1225 = vsel %vm420, %v1219, %v1220
    %v1226 = vsel %vm420, %v1222, %v1219
    %v1227 = vmul.f32 %v1225, %v148
    %v1228 = vmul.f32 %v1224, %v149
    %v1229 = vmul.f32 %v1223, %v150
    %v1230 = vmul.f32 %v1226, %v151
    %v1231 = vpack.c.bf16 %v1216, %v1215
    %v1232 = vpack.c.bf16 %v1204, %v1203
    %v1233 = vpack.c.bf16 %v1228, %v1227
    %v1234 = vpack.c.bf16 %v1218, %v1217
    %v1235 = vpack.c.bf16 %v1206, %v1205
    %v1236 = vpack.c.bf16 %v1230, %v1229
    %v1237 = vld [vmem:[%s3] sm:$0xf]
    %v1238 = vld [vmem:[%s3 + $0x4] sm:$0xf]
    %v1239 = vld [vmem:[%s3 + $0x8] sm:$0xf]
    %v1240 = vld [vmem:[%s3 + $0xc] sm:$0xf]
    %v1241 = vld [vmem:[%s3 + $0x10] sm:$0xf]
    %v1242 = vld [vmem:[%s3 + $0x14] sm:$0xf]
    %v1243 = vld [vmem:[%s3 + $0x18] sm:$0xf]
    %v1244 = vld [vmem:[%s3 + $0x1c] sm:$0xf]
    %v1245 = vld [vmem:[%s3 + $0x20] sm:$0xf]
    %v1246 = vld [vmem:[%s3 + $0x24] sm:$0xf]
    %v1247 = vld [vmem:[%s3 + $0x28] sm:$0xf]
    %v1248 = vld [vmem:[%s3 + $0x2c] sm:$0xf]
    %v1249 = vld [vmem:[%s3 + $0x30] sm:$0xf]
    %v1250 = vld [vmem:[%s3 + $0x34] sm:$0xf]
    %v1251 = vld [vmem:[%s3 + $0x38] sm:$0xf]
    %v1252 = vld [vmem:[%s3 + $0x3c] sm:$0xf]
    %v1253 = vld [vmem:[%s3 + $0x40] sm:$0xf]
    %v1254 = vld [vmem:[%s3 + $0x44] sm:$0xf]
    %v1255 = vld [vmem:[%s3 + $0x48] sm:$0xf]
    %v1256 = vld [vmem:[%s3 + $0x4c] sm:$0xf]
    %v1257 = vld [vmem:[%s3 + $0x50] sm:$0xf]
    %v1258 = vld [vmem:[%s3 + $0x54] sm:$0xf]
    %v1259 = vld [vmem:[%s3 + $0x58] sm:$0xf]
    %v1260 = vld [vmem:[%s3 + $0x5c] sm:$0xf]
    %v1261 = vld [vmem:[%s3 + $0x60] sm:$0xf]
    %v1262 = vld [vmem:[%s3 + $0x64] sm:$0xf]
    %v1263 = vld [vmem:[%s3 + $0x68] sm:$0xf]
    %v1264 = vld [vmem:[%s3 + $0x6c] sm:$0xf]
    %v1265 = vld [vmem:[%s3 + $0x70] sm:$0xf]
    %v1266 = vld [vmem:[%s3 + $0x74] sm:$0xf]
    %v1267 = vld [vmem:[%s3 + $0x78] sm:$0xf]
    %v1268 = vld [vmem:[%s3 + $0x7c] sm:$0xf]
    %v1269 = vld [vmem:[%s3 + $0x80] sm:$0xf]
    %v1270 = vld [vmem:[%s3 + $0x84] sm:$0xf]
    %v1271 = vld [vmem:[%s3 + $0x88] sm:$0xf]
    %v1272 = vld [vmem:[%s3 + $0x8c] sm:$0xf]
    %v1273 = vld [vmem:[%s3 + $0x90] sm:$0xf]
    %v1274 = vld [vmem:[%s3 + $0x94] sm:$0xf]
    %v1275 = vld [vmem:[%s3 + $0x98] sm:$0xf]
    %v1276 = vld [vmem:[%s3 + $0x9c] sm:$0xf]
    %v1277 = vld [vmem:[%s3 + $0xa0] sm:$0xf]
    %v1278 = vld [vmem:[%s3 + $0xa4] sm:$0xf]
    %v1279 = vld [vmem:[%s3 + $0xa8] sm:$0xf]
    %v1280 = vld [vmem:[%s3 + $0xac] sm:$0xf]
    %v1281 = vld [vmem:[%s3 + $0xb0] sm:$0xf]
    %v1282 = vld [vmem:[%s3 + $0xb4] sm:$0xf]
    %v1283 = vld [vmem:[%s3 + $0xb8] sm:$0xf]
    %v1284 = vld [vmem:[%s3 + $0xbc] sm:$0xf]
    %v1285 = vld [vmem:[%s7 + $0x5] ss:$0 sm:$0xff]
    %v1334 = vunpack.c.l.b16 %v1237
    %v1335 = vunpack.c.l.b16 %v1238
    %v1336 = vunpack.c.l.b16 %v1239
    %v1337 = vunpack.c.l.b16 %v1240
    %v1338 = vunpack.c.l.b16 %v1241
    %v1339 = vunpack.c.l.b16 %v1242
    %v1340 = vunpack.c.l.b16 %v1243
    %v1341 = vunpack.c.l.b16 %v1244
    %v1342 = vunpack.c.l.b16 %v1245
    %v1343 = vunpack.c.l.b16 %v1246
    %v1344 = vunpack.c.l.b16 %v1247
    %v1345 = vunpack.c.l.b16 %v1248
    %v1346 = vunpack.c.l.b16 %v1249
    %v1347 = vunpack.c.l.b16 %v1250
    %v1348 = vunpack.c.l.b16 %v1251
    %v1349 = vunpack.c.l.b16 %v1252
    %v1350 = vunpack.c.l.b16 %v1253
    %v1351 = vunpack.c.l.b16 %v1254
    %v1352 = vunpack.c.l.b16 %v1255
    %v1353 = vunpack.c.l.b16 %v1256
    %v1354 = vunpack.c.l.b16 %v1257
    %v1355 = vunpack.c.l.b16 %v1258
    %v1356 = vunpack.c.l.b16 %v1259
    %v1357 = vunpack.c.l.b16 %v1260
    %v1358 = vunpack.c.l.b16 %v1261
    %v1359 = vunpack.c.l.b16 %v1262
    %v1360 = vunpack.c.l.b16 %v1263
    %v1361 = vunpack.c.l.b16 %v1264
    %v1362 = vunpack.c.l.b16 %v1265
    %v1363 = vunpack.c.l.b16 %v1266
    %v1364 = vunpack.c.l.b16 %v1267
    %v1365 = vunpack.c.l.b16 %v1268
    %v1366 = vunpack.c.l.b16 %v1269
    %v1367 = vunpack.c.l.b16 %v1270
    %v1368 = vunpack.c.l.b16 %v1271
    %v1369 = vunpack.c.l.b16 %v1272
    %v1370 = vunpack.c.l.b16 %v1273
    %v1371 = vunpack.c.l.b16 %v1274
    %v1372 = vunpack.c.l.b16 %v1275
    %v1373 = vunpack.c.l.b16 %v1276
    %v1374 = vunpack.c.l.b16 %v1277
    %v1375 = vunpack.c.l.b16 %v1278
    %v1376 = vunpack.c.l.b16 %v1279
    %v1377 = vunpack.c.l.b16 %v1280
    %v1378 = vunpack.c.l.b16 %v1281
    %v1379 = vunpack.c.l.b16 %v1282
    %v1380 = vunpack.c.l.b16 %v1283
    %v1381 = vunpack.c.l.b16 %v1284
    %v1382 = vpack.c.b16 %v1335, %v1334
    %v1383 = vpack.c.b16 %v1337, %v1336
    %v1384 = vpack.c.b16 %v1339, %v1338
    %v1385 = vpack.c.b16 %v1341, %v1340
    %v1386 = vpack.c.b16 %v1343, %v1342
    %v1387 = vpack.c.b16 %v1345, %v1344
    %v1388 = vpack.c.b16 %v1347, %v1346
    %v1389 = vpack.c.b16 %v1349, %v1348
    %v1390 = vpack.c.b16 %v1351, %v1350
    %v1391 = vpack.c.b16 %v1353, %v1352
    %v1392 = vpack.c.b16 %v1355, %v1354
    %v1393 = vpack.c.b16 %v1357, %v1356
    %v1394 = vpack.c.b16 %v1359, %v1358
    %v1395 = vpack.c.b16 %v1361, %v1360
    %v1396 = vpack.c.b16 %v1363, %v1362
    %v1397 = vpack.c.b16 %v1365, %v1364
    %v1398 = vpack.c.b16 %v1367, %v1366
    %v1399 = vpack.c.b16 %v1369, %v1368
    %v1400 = vpack.c.b16 %v1371, %v1370
    %v1401 = vpack.c.b16 %v1373, %v1372
    %v1402 = vpack.c.b16 %v1375, %v1374
    %v1403 = vpack.c.b16 %v1377, %v1376
    %v1404 = vpack.c.b16 %v1379, %v1378
    %v1405 = vpack.c.b16 %v1381, %v1380
    %1430 = vmatprep.subr.bf16.mxu0 0
    %1431 = vmatpush1.bf16.msra.mxu0 %v1382
    %1432 = vmatprep.subr.bf16.mxu0 0
    %1433 = vmatpush1.bf16.msra.mxu0 %v1383
    %1434 = vmatprep.subr.bf16.mxu0 0
    %1435 = vmatpush1.bf16.msra.mxu0 %v1384
    %1436 = vmatprep.subr.bf16.mxu0 0
    %1437 = vmatpush1.bf16.msra.mxu0 %v1385
    %1438 = vmatprep.subr.bf16.mxu0 0
    %1439 = vmatpush1.bf16.msra.mxu0 %v1386
    %1440 = vmatprep.subr.bf16.mxu0 0
    %1441 = vmatpush1.bf16.msra.mxu0 %v1387
    %1442 = vmatprep.subr.bf16.mxu0 0
    %1443 = vmatpush1.bf16.msra.mxu0 %v1388
    %1444 = vmatprep.subr.bf16.mxu0 0
    %1445 = vmatpush1.bf16.msra.mxu0 %v1389
    %1446 = vmatprep.subr.bf16.mxu0 0
    %1447 = vmatpush1.bf16.msra.mxu0 %v1390
    %1448 = vmatprep.subr.bf16.mxu0 0
    %1449 = vmatpush1.bf16.msra.mxu0 %v1391
    %1450 = vmatprep.subr.bf16.mxu0 0
    %1451 = vmatpush1.bf16.msra.mxu0 %v1392
    %1452 = vmatprep.subr.bf16.mxu0 0
    %1453 = vmatpush1.bf16.msra.mxu0 %v1393
    %1454 = vmatprep.subr.bf16.mxu0 0
    %1455 = vmatpush1.bf16.msra.mxu0 %v1394
    %1456 = vmatprep.subr.bf16.mxu0 0
    %1457 = vmatpush1.bf16.msra.mxu0 %v1395
    %1458 = vmatprep.subr.bf16.mxu0 0
    %1459 = vmatpush1.bf16.msra.mxu0 %v1396
    %1460 = vmatprep.subr.bf16.mxu0 0
    %1461 = vmatpush1.bf16.msra.mxu0 %v1397
    %1462 = vmatprep.mubr.bf16.mxu0 %v1232
    %1463 = vmatmul.mubr.bf16.gmra.mrb[0].mxu0 %v1231
    %v1464 = vpop.f32.mrb[0].mxu0
    %v1465 = vadd.f32 %v1285, %v1464
    %v1466 = vpop.f32.mrb[0].mxu0
    %v1467 = vpop.f32.mrb[0].mxu0
    %v1468 = vadd.f32 %v1285, %v1467
    %v1469 = vpop.f32.mrb[0].mxu0
    %1470 = vmatprep.mubr.bf16.mxu0 %v1235
    %1471 = vmatmul.mubr.bf16.gmra.mrb[0].mxu0 %v1234
    %v1472 = vpop.f32.mrb[0].mxu0
    %v1473 = vadd.f32 %v1285, %v1472
    %v1474 = vpop.f32.mrb[0].mxu0
    %v1475 = vpop.f32.mrb[0].mxu0
    %v1476 = vadd.f32 %v1285, %v1475
    %v1477 = vpop.f32.mrb[0].mxu0
    %1478 = vdwg.mxu0
    %1479 = vmatprep.subr.bf16.mxu0 0
    %1480 = vmatpush1.bf16.msra.mxu0 %v1398
    %1481 = vmatprep.subr.bf16.mxu0 0
    %1482 = vmatpush1.bf16.msra.mxu0 %v1399
    %1483 = vmatprep.subr.bf16.mxu0 0
    %1484 = vmatpush1.bf16.msra.mxu0 %v1400
    %1485 = vmatprep.subr.bf16.mxu0 0
    %1486 = vmatpush1.bf16.msra.mxu0 %v1401
    %1487 = vmatprep.subr.bf16.mxu0 0
    %1488 = vmatpush1.bf16.msra.mxu0 %v1402
    %1489 = vmatprep.subr.bf16.mxu0 0
    %1490 = vmatpush1.bf16.msra.mxu0 %v1403
    %1491 = vmatprep.subr.bf16.mxu0 0
    %1492 = vmatpush1.bf16.msra.mxu0 %v1404
    %1493 = vmatprep.subr.bf16.mxu0 0
    %1494 = vmatpush1.bf16.msra.mxu0 %v1405
    %1495 = vmatprep.subr.bf16.mxu0 0
    %1496 = vmatpush1.bf16.msra.mxu0 0
    %1497 = vmatprep.subr.bf16.mxu0 0
    %1498 = vmatpush1.bf16.msra.mxu0 0
    %1499 = vmatprep.subr.bf16.mxu0 0
    %1500 = vmatpush1.bf16.msra.mxu0 0
    %1501 = vmatprep.subr.bf16.mxu0 0
    %1502 = vmatpush1.bf16.msra.mxu0 0
    %1503 = vmatprep.subr.bf16.mxu0 0
    %1504 = vmatpush1.bf16.msra.mxu0 0
    %1505 = vmatprep.subr.bf16.mxu0 0
    %1506 = vmatpush1.bf16.msra.mxu0 0
    %1507 = vmatprep.subr.bf16.mxu0 0
    %1508 = vmatpush1.bf16.msra.mxu0 0
    %1509 = vmatprep.subr.bf16.mxu0 0
    %1510 = vmatpush1.bf16.msra.mxu0 0
    %1511 = vmatprep.mubr.bf16.mxu0 0
    %1512 = vmatmul.mubr.bf16.gmra.mrb[0].mxu0 %v1233
    %v1513 = vpop.f32.mrb[0].mxu0
    %v1514 = vadd.f32 %v1465, %v1513
    %v1515 = vpop.f32.mrb[0].mxu0
    %v1516 = vpop.f32.mrb[0].mxu0
    %v1517 = vadd.f32 %v1468, %v1516
    %v1518 = vpop.f32.mrb[0].mxu0
    %1519 = vmatprep.mubr.bf16.mxu0 0
    %1520 = vmatmul.mubr.bf16.gmra.mrb[0].mxu0 %v1236
    %v1521 = vpop.f32.mrb[0].mxu0
    %v1522 = vadd.f32 %v1473, %v1521
    %v1523 = vpop.f32.mrb[0].mxu0
    %v1524 = vpop.f32.mrb[0].mxu0
    %v1525 = vadd.f32 %v1476, %v1524
    %v1526 = vpop.f32.mrb[0].mxu0
    %1527 = vdwg.mxu0
    %v1528 = vadd.f32 %v1514, %v826
    %v1529 = vadd.f32 %v1517, %v830
    %v1530 = vadd.f32 %v1522, %v836
    %v1531 = vadd.f32 %v1525, %v840
    %1532 = vst [vmem:[%s8] sm:$0xff] %v1528
    %1533 = vst [vmem:[%s8 + $0x8] sm:$0xff] %v1529
    %1534 = vst [vmem:[%s8 + $0x10] sm:$0xff] %v1530
    %1535 = vst [vmem:[%s8 + $0x18] sm:$0xff] %v1531
    // Predicated region
    $region46: #{resnet_block_forward.1} parent=1 // pred_check
      _
    $region47: #{resnet_block_forward.1} parent=1 // pred_check_branch
      %1537 = sbr.rel (0) target = $region49
    $region48: #{resnet_block_forward.1} parent=1 // pred_region
      _
    $region49: #{resnet_block_forward.1} parent=1 // pred_fallthru
      _
    // Predicated region
    $region50: #{resnet_block_forward.1} parent=1 // pred_check
      _
    $region51: #{resnet_block_forward.1} parent=1 // pred_check_branch
      %1539 = sbr.rel (0) target = $region53
    $region52: #{resnet_block_forward.1} parent=1 // pred_region
      _
    $region53: #{resnet_block_forward.1} parent=1 // pred_fallthru
      _
    %1540 = vsyncpa [#allocation3], 1
    %1541 = vsyncpa [#allocation5], 1

</llo_original>
